<compile_context>
chip_gen: v5e
topology: v5e:2x2
jax: 0.10.0
libtpu: 0.0.40
codegen_flags: <defaults>
</compile_context>

<pallas_src>
import functools
import math

import jax
import jax.numpy as jnp
from jax.experimental import pallas as pl
from jax.experimental.pallas import tpu as pltpu


# ----------------------------------------------------------------------------
# Fused TransformerBlock kernel (self-attention: value = key = query = x)
# ----------------------------------------------------------------------------
def _transformer_block_kernel(
    x_ref,        # (B, S, E)  activations for this batch block
    mask_ref,     # (B, 1, S)  key mask (1.0 = keep, 0.0 = masked)
    wv_ref,       # (E, E)     block-diagonal per-head value projection (in, out)
    wk_ref,       # (E, E)     block-diagonal per-head key projection
    wq_ref,       # (E, E)     block-diagonal per-head query projection
    wo_ref,       # (E, E)     fc_out weight (in, out)
    bo_ref,       # (1, E)     fc_out bias
    g1_ref, be1_ref,   # (1, E) LayerNorm1 gamma/beta
    w1_ref,       # (E, F)     MLP first linear (in, out)
    b1_ref,       # (1, F)
    w2_ref,       # (F, E)     MLP second linear (in, out)
    b2_ref,       # (1, E)
    g2_ref, be2_ref,   # (1, E) LayerNorm2 gamma/beta
    out_ref,      # (B, S, E)
    *,
    heads: int,
    head_dim: int,
    embed_size: int,
    block_b: int,
    seq_len: int,
):
    B, S, E, H, D = block_b, seq_len, embed_size, heads, head_dim
    rows = B * S
    scale = 1.0 / math.sqrt(float(E))

    x3 = x_ref[...].astype(jnp.float32)            # (B, S, E)
    x2 = x3.reshape(rows, E)                       # stacked batch*seq rows

    # Shared-per-head projections: one wide (rows, E) @ (E, E) matmul each
    # (block-diagonal weights built in the wrapper).
    v2 = jnp.dot(x2, wv_ref[...], preferred_element_type=jnp.float32)
    k2 = jnp.dot(x2, wk_ref[...], preferred_element_type=jnp.float32)
    q2 = jnp.dot(x2, wq_ref[...], preferred_element_type=jnp.float32)
    v3 = v2.reshape(B, S, E)
    k3 = k2.reshape(B, S, E)
    q3 = q2.reshape(B, S, E)

    # Additive key-mask bias, hoisted out of the head loop; applied after the
    # 1/sqrt(E) scaling (same softmax result as masked_fill(-1e12) pre-scale).
    neg_bias = jnp.where(mask_ref[...] == 0.0, -1e30, 0.0).astype(jnp.float32)  # (B,1,S)

    # concat_h(att_h @ v_h) @ Wo  ==  sum_h (att_h @ v_h) @ Wo[hD:(h+1)D, :]
    attn = jnp.zeros((rows, E), jnp.float32)
    for h in range(H):
        lo, hi = h * D, (h + 1) * D
        qh = q3[:, :, lo:hi]                       # (B, S, D)
        kh = k3[:, :, lo:hi]
        vh = v3[:, :, lo:hi]
        energy = jnp.einsum('bqd,bkd->bqk', qh, kh,
                            preferred_element_type=jnp.float32)    # (B, S, S)
        logits = energy * scale + neg_bias
        logits = logits - jnp.max(logits, axis=-1, keepdims=True)
        p = jnp.exp(logits)
        att = p * pl.reciprocal(jnp.sum(p, axis=-1, keepdims=True), approx=True)
        oh = jnp.einsum('bqk,bkd->bqd', att, vh,
                        preferred_element_type=jnp.float32)        # (B, S, D)
        attn = attn + jnp.dot(oh.reshape(rows, D), wo_ref[lo:hi, :],
                              preferred_element_type=jnp.float32)
    attn = attn + bo_ref[...]

    def layernorm(v, g, b):
        mu = jnp.mean(v, axis=-1, keepdims=True)
        c = v - mu
        var = jnp.mean(c * c, axis=-1, keepdims=True)
        return c * jax.lax.rsqrt(var + 1e-5) * g + b

    # norm1(attention + query)   (dropout = identity at inference)
    x1 = layernorm(attn + x2, g1_ref[...], be1_ref[...])

    # feed forward: Linear -> ReLU -> Linear, on the stacked rows.
    hid = jnp.maximum(
        jnp.dot(x1, w1_ref[...], preferred_element_type=jnp.float32) + b1_ref[...],
        0.0)
    ff = jnp.dot(hid, w2_ref[...], preferred_element_type=jnp.float32) + b2_ref[...]

    # norm2(forward + x)
    out_ref[...] = layernorm(ff + x1, g2_ref[...], be2_ref[...]).reshape(B, S, E)


# ----------------------------------------------------------------------------
# Wrapper
# ----------------------------------------------------------------------------
def _block_diag(w, heads):
    """(D, D) -> (H*D, H*D) with `w` repeated on the diagonal (heads share weights)."""
    D = w.shape[0]
    eye = jnp.eye(heads, dtype=w.dtype)
    bd = eye[:, :, None, None] * w[None, None, :, :]        # (H, H, D, D)
    return bd.transpose(0, 2, 1, 3).reshape(heads * D, heads * D)


def _pick_block_b(N, S):
    """Batch elements per grid step: aim for ~128 stacked rows per step, but
    keep at least two grid blocks when N >= 2 so both v7x TensorCores get work."""
    bb = max(1, min(N, 128 // max(S, 1)))
    if N >= 2:
        bb = max(1, min(bb, N // 2))
    while N % bb:
        bb -= 1
    return bb


def _full_spec(shape):
    nd = len(shape)
    return pl.BlockSpec(shape, lambda n, _nd=nd: (0,) * _nd)


def transformer_block(x, mask_f, layer_params):
    """x: (N, S, E) f32, mask_f: (N, 1, S) f32. Returns (N, S, E) f32."""
    N, S, E = x.shape
    (wv_t, wk_t, wq_t, wo_t, bo, g1, be1, w1_t, b1, w2_t, b2, g2, be2) = layer_params
    D = wv_t.shape[0]
    H = E // D
    BB = _pick_block_b(N, S)

    # Build the block-diagonal (E, E) projection weights once in the wrapper so
    # the kernel does a single wide matmul per projection (no per-head loop).
    wv_bd = _block_diag(wv_t, H)
    wk_bd = _block_diag(wk_t, H)
    wq_bd = _block_diag(wq_t, H)

    kernel = functools.partial(
        _transformer_block_kernel, heads=H, head_dim=D, embed_size=E,
        block_b=BB, seq_len=S)

    # TODO(synk): at realistic E/F, cast matmul inputs to bf16 (v6e/v7x) and tile
    # w1/w2 along F with an "arbitrary" reduction grid axis + VMEM accumulator
    # instead of the full-array weight specs used here (VMEM budget on v7x is
    # 64 MiB per TensorCore).
    return pl.pallas_call(
        kernel,
        out_shape=jax.ShapeDtypeStruct((N, S, E), jnp.float32),
        grid=(N // BB,),
        in_specs=[
            pl.BlockSpec((BB, S, E), lambda n: (n, 0, 0)),   # x (batch block)
            pl.BlockSpec((BB, 1, S), lambda n: (n, 0, 0)),   # mask
            _full_spec(wv_bd.shape), _full_spec(wk_bd.shape), _full_spec(wq_bd.shape),
            _full_spec(wo_t.shape), _full_spec(bo.shape),
            _full_spec(g1.shape), _full_spec(be1.shape),
            _full_spec(w1_t.shape), _full_spec(b1.shape),
            _full_spec(w2_t.shape), _full_spec(b2.shape),
            _full_spec(g2.shape), _full_spec(be2.shape),
        ],
        out_specs=pl.BlockSpec((BB, S, E), lambda n: (n, 0, 0)),
        compiler_params=pltpu.CompilerParams(
            dimension_semantics=("parallel",),
            vmem_limit_bytes=32 * 1024 * 1024),
    )(x, mask_f, wv_bd, wk_bd, wq_bd, wo_t, bo, g1, be1, w1_t, b1, w2_t, b2, g2, be2)


# ----------------------------------------------------------------------------
# Encoder forward (embedding glue in plain JAX, layers via the Pallas kernel)
# ----------------------------------------------------------------------------
def encoder_forward(tokens, mask, params):
    word_emb, pos_emb, layers = params
    N, S = tokens.shape
    positions = jnp.broadcast_to(jnp.arange(S, dtype=jnp.int32), (N, S))
    out = jnp.take(word_emb, tokens, axis=0) + jnp.take(pos_emb, positions, axis=0)
    out = out.astype(jnp.float32)                      # (N, S, E); dropout = identity
    mask_f = mask.astype(jnp.float32).reshape(N, 1, S)
    for lp in layers:
        out = transformer_block(out, mask_f, lp)
    return out


# ----------------------------------------------------------------------------
# Deterministic parameter construction (mirrors the nn.Module __init__ shapes)
# ----------------------------------------------------------------------------
def init_params(key, *, vocab, embed_size, num_layers, heads, forward_expansion,
                max_length):
    D = embed_size // heads
    F = embed_size * forward_expansion
    keys = jax.random.split(key, 2 + num_layers * 7)
    word_emb = 0.1 * jax.random.normal(keys[0], (vocab, embed_size), jnp.float32)
    pos_emb = 0.1 * jax.random.normal(keys[1], (max_length, embed_size), jnp.float32)

    layers = []
    for l in range(num_layers):
        k = keys[2 + 7 * l: 2 + 7 * (l + 1)]
        # nn.Linear weights are (out, in); we store transposed (in, out).
        wv_t = 0.1 * jax.random.normal(k[0], (D, D), jnp.float32)
        wk_t = 0.1 * jax.random.normal(k[1], (D, D), jnp.float32)
        wq_t = 0.1 * jax.random.normal(k[2], (D, D), jnp.float32)
        wo_t = 0.1 * jax.random.normal(k[3], (embed_size, embed_size), jnp.float32)
        bo = 0.1 * jax.random.normal(k[4], (1, embed_size), jnp.float32)
        g1 = jnp.ones((1, embed_size), jnp.float32)
        be1 = jnp.zeros((1, embed_size), jnp.float32)
        w1_t = 0.1 * jax.random.normal(k[5], (embed_size, F), jnp.float32)
        b1 = jnp.zeros((1, F), jnp.float32)
        w2_t = 0.1 * jax.random.normal(k[6], (F, embed_size), jnp.float32)
        b2 = jnp.zeros((1, embed_size), jnp.float32)
        g2 = jnp.ones((1, embed_size), jnp.float32)
        be2 = jnp.zeros((1, embed_size), jnp.float32)
        layers.append((wv_t, wk_t, wq_t, wo_t, bo, g1, be1,
                       w1_t, b1, w2_t, b2, g2, be2))
    return word_emb, pos_emb, layers


# ----------------------------------------------------------------------------
# Pure-JAX reference (same math, no Pallas) for a correctness check
# ----------------------------------------------------------------------------
def encoder_reference(tokens, mask, params, *, heads, embed_size):
    word_emb, pos_emb, layers = params
    N, S = tokens.shape
    D = embed_size // heads
    positions = jnp.broadcast_to(jnp.arange(S, dtype=jnp.int32), (N, S))
    out = jnp.take(word_emb, tokens, axis=0) + jnp.take(pos_emb, positions, axis=0)

    def ln(v, g, b):
        mu = jnp.mean(v, -1, keepdims=True)
        var = jnp.mean((v - mu) ** 2, -1, keepdims=True)
        return (v - mu) / jnp.sqrt(var + 1e-5) * g + b

    mask4 = mask.astype(jnp.float32)[:, None, None, :]            # (N,1,1,S)
    for (wv_t, wk_t, wq_t, wo_t, bo, g1, be1, w1_t, b1, w2_t, b2, g2, be2) in layers:
        x = out
        xr = x.reshape(N, S, heads, D)
        v = jnp.einsum('nshd,de->nshe', xr, wv_t)
        k = jnp.einsum('nshd,de->nshe', xr, wk_t)
        q = jnp.einsum('nshd,de->nshe', xr, wq_t)
        energy = jnp.einsum('nqhd,nkhd->nhqk', q, k)
        energy = jnp.where(mask4 == 0.0, -1e12, energy)
        att = jax.nn.softmax(energy / math.sqrt(embed_size), axis=3)
        o = jnp.einsum('nhql,nlhd->nqhd', att, v).reshape(N, S, heads * D)
        attn = o @ wo_t + bo
        x1 = ln(attn + x, g1, be1)
        ff = jnp.maximum(x1 @ w1_t + b1, 0.0) @ w2_t + b2
        out = ln(ff + x1, g2, be2)
    return out


if __name__ == "__main__":
    # Small config consistent with the module's forward pass.
    VOCAB = 50
    EMBED = 32
    NUM_LAYERS = 2
    HEADS = 4
    FWD_EXP = 4
    MAX_LEN = 16
    N, S = 2, 8

    key = jax.random.PRNGKey(0)
    kp, kt = jax.random.split(key)
    params = init_params(kp, vocab=VOCAB, embed_size=EMBED, num_layers=NUM_LAYERS,
                         heads=HEADS, forward_expansion=FWD_EXP, max_length=MAX_LEN)

    tokens = jax.random.randint(kt, (N, S), 0, VOCAB, dtype=jnp.int32)
    # mask: 1 = valid key position, 0 = masked (padding)
    lengths = jnp.array([S, 5], dtype=jnp.int32)
    mask = (jnp.arange(S)[None, :] < lengths[:, None]).astype(jnp.int32)   # (N, S)

    out = encoder_forward(tokens, mask, params)
    out = jax.block_until_ready(out)
    assert out.shape == (N, S, EMBED), out.shape

    ref = encoder_reference(tokens, mask, params, heads=HEADS, embed_size=EMBED)
    # Tolerance accounts for the approximate (EUP) reciprocal in the softmax
    # denominator (~1e-3 relative) accumulated over two layers.
    assert jnp.allclose(out, ref, rtol=2e-2, atol=2e-2), \
        float(jnp.max(jnp.abs(out - ref)))

    print("KERNEL_OK")
</pallas_src>

<mosaic_0001>
module attributes {stable_mosaic.version = 11 : i64} {
  func.func @_transformer_block_kernel(%arg0: i32, %arg1: memref<1x8x32xf32, #tpu.memory_space<vmem>>, %arg2: memref<1x1x8xf32, #tpu.memory_space<vmem>>, %arg3: memref<32x32xf32, #tpu.memory_space<vmem>>, %arg4: memref<32x32xf32, #tpu.memory_space<vmem>>, %arg5: memref<32x32xf32, #tpu.memory_space<vmem>>, %arg6: memref<32x32xf32, #tpu.memory_space<vmem>>, %arg7: memref<1x32xf32, #tpu.memory_space<vmem>>, %arg8: memref<1x32xf32, #tpu.memory_space<vmem>>, %arg9: memref<1x32xf32, #tpu.memory_space<vmem>>, %arg10: memref<32x128xf32, #tpu.memory_space<vmem>>, %arg11: memref<1x128xf32, #tpu.memory_space<vmem>>, %arg12: memref<128x32xf32, #tpu.memory_space<vmem>>, %arg13: memref<1x32xf32, #tpu.memory_space<vmem>>, %arg14: memref<1x32xf32, #tpu.memory_space<vmem>>, %arg15: memref<1x32xf32, #tpu.memory_space<vmem>>, %arg16: memref<1x8x32xf32, #tpu.memory_space<vmem>>) attributes {dimension_semantics = [#tpu.dimension_semantics<parallel>], iteration_bounds = array<i64: 2>, scalar_prefetch = 0 : i64, scratch_operands = 0 : i64, tpu.core_type = #tpu.core_type<tc>, window_params = [{transform_indices = @transform_0, window_bounds = array<i64: 1, 8, 32>}, {transform_indices = @transform_1, window_bounds = array<i64: 1, 1, 8>}, {pipeline_mode = #tpu.pipeline_mode<synchronous>, transform_indices = @transform_2, window_bounds = array<i64: 32, 32>}, {pipeline_mode = #tpu.pipeline_mode<synchronous>, transform_indices = @transform_3, window_bounds = array<i64: 32, 32>}, {pipeline_mode = #tpu.pipeline_mode<synchronous>, transform_indices = @transform_4, window_bounds = array<i64: 32, 32>}, {pipeline_mode = #tpu.pipeline_mode<synchronous>, transform_indices = @transform_5, window_bounds = array<i64: 32, 32>}, {pipeline_mode = #tpu.pipeline_mode<synchronous>, transform_indices = @transform_6, window_bounds = array<i64: 1, 32>}, {pipeline_mode = #tpu.pipeline_mode<synchronous>, transform_indices = @transform_7, window_bounds = array<i64: 1, 32>}, {pipeline_mode = #tpu.pipeline_mode<synchronous>, transform_indices = @transform_8, window_bounds = array<i64: 1, 32>}, {pipeline_mode = #tpu.pipeline_mode<synchronous>, transform_indices = @transform_9, window_bounds = array<i64: 32, 128>}, {pipeline_mode = #tpu.pipeline_mode<synchronous>, transform_indices = @transform_10, window_bounds = array<i64: 1, 128>}, {pipeline_mode = #tpu.pipeline_mode<synchronous>, transform_indices = @transform_11, window_bounds = array<i64: 128, 32>}, {pipeline_mode = #tpu.pipeline_mode<synchronous>, transform_indices = @transform_12, window_bounds = array<i64: 1, 32>}, {pipeline_mode = #tpu.pipeline_mode<synchronous>, transform_indices = @transform_13, window_bounds = array<i64: 1, 32>}, {pipeline_mode = #tpu.pipeline_mode<synchronous>, transform_indices = @transform_14, window_bounds = array<i64: 1, 32>}, {transform_indices = @transform_15, window_bounds = array<i64: 1, 8, 32>}]} {
    %c0 = arith.constant 0 : index
    %c0_0 = arith.constant 0 : index
    %c0_1 = arith.constant 0 : index
    %0 = vector.load %arg1[%c0, %c0_0, %c0_1] : memref<1x8x32xf32, #tpu.memory_space<vmem>>, vector<1x8x32xf32>
    %1 = vector.shape_cast %0 : vector<1x8x32xf32> to vector<8x32xf32>
    %c0_2 = arith.constant 0 : index
    %c0_3 = arith.constant 0 : index
    %2 = vector.load %arg3[%c0_2, %c0_3] : memref<32x32xf32, #tpu.memory_space<vmem>>, vector<32x32xf32>
    %cst = arith.constant dense<0.000000e+00> : vector<8x32xf32>
    %3 = tpu.matmul %1, %2, %cst {dimension_numbers = #tpu.dot_dimension_numbers<[1], [0], [0], [1], [0, 0, 1, 1], [], []>} : vector<8x32xf32>, vector<32x32xf32>, vector<8x32xf32> -> vector<8x32xf32>
    %c0_4 = arith.constant 0 : index
    %c0_5 = arith.constant 0 : index
    %4 = vector.load %arg4[%c0_4, %c0_5] : memref<32x32xf32, #tpu.memory_space<vmem>>, vector<32x32xf32>
    %cst_6 = arith.constant dense<0.000000e+00> : vector<8x32xf32>
    %5 = tpu.matmul %1, %4, %cst_6 {dimension_numbers = #tpu.dot_dimension_numbers<[1], [0], [0], [1], [0, 0, 1, 1], [], []>} : vector<8x32xf32>, vector<32x32xf32>, vector<8x32xf32> -> vector<8x32xf32>
    %c0_7 = arith.constant 0 : index
    %c0_8 = arith.constant 0 : index
    %6 = vector.load %arg5[%c0_7, %c0_8] : memref<32x32xf32, #tpu.memory_space<vmem>>, vector<32x32xf32>
    %cst_9 = arith.constant dense<0.000000e+00> : vector<8x32xf32>
    %7 = tpu.matmul %1, %6, %cst_9 {dimension_numbers = #tpu.dot_dimension_numbers<[1], [0], [0], [1], [0, 0, 1, 1], [], []>} : vector<8x32xf32>, vector<32x32xf32>, vector<8x32xf32> -> vector<8x32xf32>
    %8 = vector.shape_cast %3 : vector<8x32xf32> to vector<1x8x32xf32>
    %9 = vector.shape_cast %5 : vector<8x32xf32> to vector<1x8x32xf32>
    %10 = vector.shape_cast %7 : vector<8x32xf32> to vector<1x8x32xf32>
    %c0_10 = arith.constant 0 : index
    %c0_11 = arith.constant 0 : index
    %c0_12 = arith.constant 0 : index
    %11 = vector.load %arg2[%c0_10, %c0_11, %c0_12] : memref<1x1x8xf32, #tpu.memory_space<vmem>>, vector<1x1x8xf32>
    %cst_13 = arith.constant 0.000000e+00 : f32
    %12 = vector.broadcast %cst_13 : f32 to vector<1x1x8xf32>
    %13 = arith.cmpf oeq, %11, %12 : vector<1x1x8xf32>
    %cst_14 = arith.constant -1.000000e+30 : f32
    %cst_15 = arith.constant 0.000000e+00 : f32
    %14 = vector.broadcast %cst_14 : f32 to vector<1x1x8xf32>
    %15 = vector.broadcast %cst_15 : f32 to vector<1x1x8xf32>
    %16 = arith.select %13, %14, %15 : vector<1x1x8xi1>, vector<1x1x8xf32>
    %cst_16 = arith.constant 0.000000e+00 : f32
    %17 = vector.broadcast %cst_16 : f32 to vector<8x32xf32>
    %18 = vector.extract_strided_slice %10 {offsets = [0, 0, 0], sizes = [1, 8, 8], strides = [1, 1, 1]} : vector<1x8x32xf32> to vector<1x8x8xf32>
    %19 = vector.extract_strided_slice %9 {offsets = [0, 0, 0], sizes = [1, 8, 8], strides = [1, 1, 1]} : vector<1x8x32xf32> to vector<1x8x8xf32>
    %20 = vector.extract_strided_slice %8 {offsets = [0, 0, 0], sizes = [1, 8, 8], strides = [1, 1, 1]} : vector<1x8x32xf32> to vector<1x8x8xf32>
    "tpu.trace_start"() <{level = 10 : i32, message = "bqd,bkd->bqk"}> : () -> ()
    %cst_17 = arith.constant dense<0.000000e+00> : vector<1x8x8xf32>
    %21 = tpu.matmul %18, %19, %cst_17 {dimension_numbers = #tpu.dot_dimension_numbers<[2], [2], [1], [1], [0, 0, 0, 1, 1, 1], [0], [0]>} : vector<1x8x8xf32>, vector<1x8x8xf32>, vector<1x8x8xf32> -> vector<1x8x8xf32>
    "tpu.trace_stop"() : () -> ()
    %cst_18 = arith.constant 0.176776692 : f32
    %22 = vector.broadcast %cst_18 : f32 to vector<1x8x8xf32>
    %23 = arith.mulf %21, %22 : vector<1x8x8xf32>
    %24 = vector.broadcast %16 : vector<1x1x8xf32> to vector<1x8x8xf32>
    %25 = arith.addf %23, %24 : vector<1x8x8xf32>
    %cst_19 = arith.constant dense<0xFF800000> : vector<1x8xf32>
    %26 = vector.multi_reduction <maximumf>, %25, %cst_19 [2] : vector<1x8x8xf32> to vector<1x8xf32>
    %27 = vector.shape_cast %26 : vector<1x8xf32> to vector<1x8x1xf32>
    %28 = vector.broadcast %27 : vector<1x8x1xf32> to vector<1x8x8xf32>
    %29 = arith.subf %25, %28 : vector<1x8x8xf32>
    %30 = math.exp %29 : vector<1x8x8xf32>
    %cst_20 = arith.constant dense<0.000000e+00> : vector<1x8xf32>
    %31 = vector.multi_reduction <add>, %30, %cst_20 [2] : vector<1x8x8xf32> to vector<1x8xf32>
    %32 = vector.shape_cast %31 : vector<1x8xf32> to vector<1x8x1xf32>
    %33 = tpu.reciprocal %32 {approx = true} : vector<1x8x1xf32> -> vector<1x8x1xf32>
    %34 = vector.broadcast %33 : vector<1x8x1xf32> to vector<1x8x8xf32>
    %35 = arith.mulf %30, %34 : vector<1x8x8xf32>
    "tpu.trace_start"() <{level = 10 : i32, message = "bqk,bkd->bqd"}> : () -> ()
    %cst_21 = arith.constant dense<0.000000e+00> : vector<1x8x8xf32>
    %36 = tpu.matmul %35, %20, %cst_21 {dimension_numbers = #tpu.dot_dimension_numbers<[2], [1], [1], [2], [0, 0, 0, 1, 1, 2], [0], [0]>} : vector<1x8x8xf32>, vector<1x8x8xf32>, vector<1x8x8xf32> -> vector<1x8x8xf32>
    "tpu.trace_stop"() : () -> ()
    %37 = vector.shape_cast %36 : vector<1x8x8xf32> to vector<8x8xf32>
    %c0_22 = arith.constant 0 : index
    %c0_23 = arith.constant 0 : index
    %38 = vector.load %arg6[%c0_22, %c0_23] : memref<32x32xf32, #tpu.memory_space<vmem>>, vector<8x32xf32>
    %cst_24 = arith.constant dense<0.000000e+00> : vector<8x32xf32>
    %39 = tpu.matmul %37, %38, %cst_24 {dimension_numbers = #tpu.dot_dimension_numbers<[1], [0], [0], [1], [0, 0, 1, 1], [], []>} : vector<8x8xf32>, vector<8x32xf32>, vector<8x32xf32> -> vector<8x32xf32>
    %40 = arith.addf %17, %39 : vector<8x32xf32>
    %41 = vector.extract_strided_slice %10 {offsets = [0, 0, 8], sizes = [1, 8, 8], strides = [1, 1, 1]} : vector<1x8x32xf32> to vector<1x8x8xf32>
    %42 = vector.extract_strided_slice %9 {offsets = [0, 0, 8], sizes = [1, 8, 8], strides = [1, 1, 1]} : vector<1x8x32xf32> to vector<1x8x8xf32>
    %43 = vector.extract_strided_slice %8 {offsets = [0, 0, 8], sizes = [1, 8, 8], strides = [1, 1, 1]} : vector<1x8x32xf32> to vector<1x8x8xf32>
    "tpu.trace_start"() <{level = 10 : i32, message = "bqd,bkd->bqk"}> : () -> ()
    %cst_25 = arith.constant dense<0.000000e+00> : vector<1x8x8xf32>
    %44 = tpu.matmul %41, %42, %cst_25 {dimension_numbers = #tpu.dot_dimension_numbers<[2], [2], [1], [1], [0, 0, 0, 1, 1, 1], [0], [0]>} : vector<1x8x8xf32>, vector<1x8x8xf32>, vector<1x8x8xf32> -> vector<1x8x8xf32>
    "tpu.trace_stop"() : () -> ()
    %cst_26 = arith.constant 0.176776692 : f32
    %45 = vector.broadcast %cst_26 : f32 to vector<1x8x8xf32>
    %46 = arith.mulf %44, %45 : vector<1x8x8xf32>
    %47 = vector.broadcast %16 : vector<1x1x8xf32> to vector<1x8x8xf32>
    %48 = arith.addf %46, %47 : vector<1x8x8xf32>
    %cst_27 = arith.constant dense<0xFF800000> : vector<1x8xf32>
    %49 = vector.multi_reduction <maximumf>, %48, %cst_27 [2] : vector<1x8x8xf32> to vector<1x8xf32>
    %50 = vector.shape_cast %49 : vector<1x8xf32> to vector<1x8x1xf32>
    %51 = vector.broadcast %50 : vector<1x8x1xf32> to vector<1x8x8xf32>
    %52 = arith.subf %48, %51 : vector<1x8x8xf32>
    %53 = math.exp %52 : vector<1x8x8xf32>
    %cst_28 = arith.constant dense<0.000000e+00> : vector<1x8xf32>
    %54 = vector.multi_reduction <add>, %53, %cst_28 [2] : vector<1x8x8xf32> to vector<1x8xf32>
    %55 = vector.shape_cast %54 : vector<1x8xf32> to vector<1x8x1xf32>
    %56 = tpu.reciprocal %55 {approx = true} : vector<1x8x1xf32> -> vector<1x8x1xf32>
    %57 = vector.broadcast %56 : vector<1x8x1xf32> to vector<1x8x8xf32>
    %58 = arith.mulf %53, %57 : vector<1x8x8xf32>
    "tpu.trace_start"() <{level = 10 : i32, message = "bqk,bkd->bqd"}> : () -> ()
    %cst_29 = arith.constant dense<0.000000e+00> : vector<1x8x8xf32>
    %59 = tpu.matmul %58, %43, %cst_29 {dimension_numbers = #tpu.dot_dimension_numbers<[2], [1], [1], [2], [0, 0, 0, 1, 1, 2], [0], [0]>} : vector<1x8x8xf32>, vector<1x8x8xf32>, vector<1x8x8xf32> -> vector<1x8x8xf32>
    "tpu.trace_stop"() : () -> ()
    %60 = vector.shape_cast %59 : vector<1x8x8xf32> to vector<8x8xf32>
    %c8 = arith.constant 8 : index
    %c0_30 = arith.constant 0 : index
    %61 = vector.load %arg6[%c8, %c0_30] : memref<32x32xf32, #tpu.memory_space<vmem>>, vector<8x32xf32>
    %cst_31 = arith.constant dense<0.000000e+00> : vector<8x32xf32>
    %62 = tpu.matmul %60, %61, %cst_31 {dimension_numbers = #tpu.dot_dimension_numbers<[1], [0], [0], [1], [0, 0, 1, 1], [], []>} : vector<8x8xf32>, vector<8x32xf32>, vector<8x32xf32> -> vector<8x32xf32>
    %63 = arith.addf %40, %62 : vector<8x32xf32>
    %64 = vector.extract_strided_slice %10 {offsets = [0, 0, 16], sizes = [1, 8, 8], strides = [1, 1, 1]} : vector<1x8x32xf32> to vector<1x8x8xf32>
    %65 = vector.extract_strided_slice %9 {offsets = [0, 0, 16], sizes = [1, 8, 8], strides = [1, 1, 1]} : vector<1x8x32xf32> to vector<1x8x8xf32>
    %66 = vector.extract_strided_slice %8 {offsets = [0, 0, 16], sizes = [1, 8, 8], strides = [1, 1, 1]} : vector<1x8x32xf32> to vector<1x8x8xf32>
    "tpu.trace_start"() <{level = 10 : i32, message = "bqd,bkd->bqk"}> : () -> ()
    %cst_32 = arith.constant dense<0.000000e+00> : vector<1x8x8xf32>
    %67 = tpu.matmul %64, %65, %cst_32 {dimension_numbers = #tpu.dot_dimension_numbers<[2], [2], [1], [1], [0, 0, 0, 1, 1, 1], [0], [0]>} : vector<1x8x8xf32>, vector<1x8x8xf32>, vector<1x8x8xf32> -> vector<1x8x8xf32>
    "tpu.trace_stop"() : () -> ()
    %cst_33 = arith.constant 0.176776692 : f32
    %68 = vector.broadcast %cst_33 : f32 to vector<1x8x8xf32>
    %69 = arith.mulf %67, %68 : vector<1x8x8xf32>
    %70 = vector.broadcast %16 : vector<1x1x8xf32> to vector<1x8x8xf32>
    %71 = arith.addf %69, %70 : vector<1x8x8xf32>
    %cst_34 = arith.constant dense<0xFF800000> : vector<1x8xf32>
    %72 = vector.multi_reduction <maximumf>, %71, %cst_34 [2] : vector<1x8x8xf32> to vector<1x8xf32>
    %73 = vector.shape_cast %72 : vector<1x8xf32> to vector<1x8x1xf32>
    %74 = vector.broadcast %73 : vector<1x8x1xf32> to vector<1x8x8xf32>
    %75 = arith.subf %71, %74 : vector<1x8x8xf32>
    %76 = math.exp %75 : vector<1x8x8xf32>
    %cst_35 = arith.constant dense<0.000000e+00> : vector<1x8xf32>
    %77 = vector.multi_reduction <add>, %76, %cst_35 [2] : vector<1x8x8xf32> to vector<1x8xf32>
    %78 = vector.shape_cast %77 : vector<1x8xf32> to vector<1x8x1xf32>
    %79 = tpu.reciprocal %78 {approx = true} : vector<1x8x1xf32> -> vector<1x8x1xf32>
    %80 = vector.broadcast %79 : vector<1x8x1xf32> to vector<1x8x8xf32>
    %81 = arith.mulf %76, %80 : vector<1x8x8xf32>
    "tpu.trace_start"() <{level = 10 : i32, message = "bqk,bkd->bqd"}> : () -> ()
    %cst_36 = arith.constant dense<0.000000e+00> : vector<1x8x8xf32>
    %82 = tpu.matmul %81, %66, %cst_36 {dimension_numbers = #tpu.dot_dimension_numbers<[2], [1], [1], [2], [0, 0, 0, 1, 1, 2], [0], [0]>} : vector<1x8x8xf32>, vector<1x8x8xf32>, vector<1x8x8xf32> -> vector<1x8x8xf32>
    "tpu.trace_stop"() : () -> ()
    %83 = vector.shape_cast %82 : vector<1x8x8xf32> to vector<8x8xf32>
    %c16 = arith.constant 16 : index
    %c0_37 = arith.constant 0 : index
    %84 = vector.load %arg6[%c16, %c0_37] : memref<32x32xf32, #tpu.memory_space<vmem>>, vector<8x32xf32>
    %cst_38 = arith.constant dense<0.000000e+00> : vector<8x32xf32>
    %85 = tpu.matmul %83, %84, %cst_38 {dimension_numbers = #tpu.dot_dimension_numbers<[1], [0], [0], [1], [0, 0, 1, 1], [], []>} : vector<8x8xf32>, vector<8x32xf32>, vector<8x32xf32> -> vector<8x32xf32>
    %86 = arith.addf %63, %85 : vector<8x32xf32>
    %87 = vector.extract_strided_slice %10 {offsets = [0, 0, 24], sizes = [1, 8, 8], strides = [1, 1, 1]} : vector<1x8x32xf32> to vector<1x8x8xf32>
    %88 = vector.extract_strided_slice %9 {offsets = [0, 0, 24], sizes = [1, 8, 8], strides = [1, 1, 1]} : vector<1x8x32xf32> to vector<1x8x8xf32>
    %89 = vector.extract_strided_slice %8 {offsets = [0, 0, 24], sizes = [1, 8, 8], strides = [1, 1, 1]} : vector<1x8x32xf32> to vector<1x8x8xf32>
    "tpu.trace_start"() <{level = 10 : i32, message = "bqd,bkd->bqk"}> : () -> ()
    %cst_39 = arith.constant dense<0.000000e+00> : vector<1x8x8xf32>
    %90 = tpu.matmul %87, %88, %cst_39 {dimension_numbers = #tpu.dot_dimension_numbers<[2], [2], [1], [1], [0, 0, 0, 1, 1, 1], [0], [0]>} : vector<1x8x8xf32>, vector<1x8x8xf32>, vector<1x8x8xf32> -> vector<1x8x8xf32>
    "tpu.trace_stop"() : () -> ()
    %cst_40 = arith.constant 0.176776692 : f32
    %91 = vector.broadcast %cst_40 : f32 to vector<1x8x8xf32>
    %92 = arith.mulf %90, %91 : vector<1x8x8xf32>
    %93 = vector.broadcast %16 : vector<1x1x8xf32> to vector<1x8x8xf32>
    %94 = arith.addf %92, %93 : vector<1x8x8xf32>
    %cst_41 = arith.constant dense<0xFF800000> : vector<1x8xf32>
    %95 = vector.multi_reduction <maximumf>, %94, %cst_41 [2] : vector<1x8x8xf32> to vector<1x8xf32>
    %96 = vector.shape_cast %95 : vector<1x8xf32> to vector<1x8x1xf32>
    %97 = vector.broadcast %96 : vector<1x8x1xf32> to vector<1x8x8xf32>
    %98 = arith.subf %94, %97 : vector<1x8x8xf32>
    %99 = math.exp %98 : vector<1x8x8xf32>
    %cst_42 = arith.constant dense<0.000000e+00> : vector<1x8xf32>
    %100 = vector.multi_reduction <add>, %99, %cst_42 [2] : vector<1x8x8xf32> to vector<1x8xf32>
    %101 = vector.shape_cast %100 : vector<1x8xf32> to vector<1x8x1xf32>
    %102 = tpu.reciprocal %101 {approx = true} : vector<1x8x1xf32> -> vector<1x8x1xf32>
    %103 = vector.broadcast %102 : vector<1x8x1xf32> to vector<1x8x8xf32>
    %104 = arith.mulf %99, %103 : vector<1x8x8xf32>
    "tpu.trace_start"() <{level = 10 : i32, message = "bqk,bkd->bqd"}> : () -> ()
    %cst_43 = arith.constant dense<0.000000e+00> : vector<1x8x8xf32>
    %105 = tpu.matmul %104, %89, %cst_43 {dimension_numbers = #tpu.dot_dimension_numbers<[2], [1], [1], [2], [0, 0, 0, 1, 1, 2], [0], [0]>} : vector<1x8x8xf32>, vector<1x8x8xf32>, vector<1x8x8xf32> -> vector<1x8x8xf32>
    "tpu.trace_stop"() : () -> ()
    %106 = vector.shape_cast %105 : vector<1x8x8xf32> to vector<8x8xf32>
    %c24 = arith.constant 24 : index
    %c0_44 = arith.constant 0 : index
    %107 = vector.load %arg6[%c24, %c0_44] : memref<32x32xf32, #tpu.memory_space<vmem>>, vector<8x32xf32>
    %cst_45 = arith.constant dense<0.000000e+00> : vector<8x32xf32>
    %108 = tpu.matmul %106, %107, %cst_45 {dimension_numbers = #tpu.dot_dimension_numbers<[1], [0], [0], [1], [0, 0, 1, 1], [], []>} : vector<8x8xf32>, vector<8x32xf32>, vector<8x32xf32> -> vector<8x32xf32>
    %109 = arith.addf %86, %108 : vector<8x32xf32>
    %c0_46 = arith.constant 0 : index
    %c0_47 = arith.constant 0 : index
    %110 = vector.load %arg7[%c0_46, %c0_47] : memref<1x32xf32, #tpu.memory_space<vmem>>, vector<1x32xf32>
    %111 = vector.broadcast %110 : vector<1x32xf32> to vector<8x32xf32>
    %112 = arith.addf %109, %111 : vector<8x32xf32>
    %113 = arith.addf %112, %1 : vector<8x32xf32>
    %c0_48 = arith.constant 0 : index
    %c0_49 = arith.constant 0 : index
    %114 = vector.load %arg8[%c0_48, %c0_49] : memref<1x32xf32, #tpu.memory_space<vmem>>, vector<1x32xf32>
    %c0_50 = arith.constant 0 : index
    %c0_51 = arith.constant 0 : index
    %115 = vector.load %arg9[%c0_50, %c0_51] : memref<1x32xf32, #tpu.memory_space<vmem>>, vector<1x32xf32>
    %cst_52 = arith.constant dense<0.000000e+00> : vector<8xf32>
    %116 = vector.multi_reduction <add>, %113, %cst_52 [1] : vector<8x32xf32> to vector<8xf32>
    %117 = vector.shape_cast %116 : vector<8xf32> to vector<8x1xf32>
    %cst_53 = arith.constant 3.200000e+01 : f32
    %118 = vector.broadcast %cst_53 : f32 to vector<8x1xf32>
    %119 = arith.divf %117, %118 : vector<8x1xf32>
    %120 = vector.broadcast %119 : vector<8x1xf32> to vector<8x32xf32>
    %121 = arith.subf %113, %120 : vector<8x32xf32>
    %122 = arith.mulf %121, %121 : vector<8x32xf32>
    %cst_54 = arith.constant dense<0.000000e+00> : vector<8xf32>
    %123 = vector.multi_reduction <add>, %122, %cst_54 [1] : vector<8x32xf32> to vector<8xf32>
    %124 = vector.shape_cast %123 : vector<8xf32> to vector<8x1xf32>
    %cst_55 = arith.constant 3.200000e+01 : f32
    %125 = vector.broadcast %cst_55 : f32 to vector<8x1xf32>
    %126 = arith.divf %124, %125 : vector<8x1xf32>
    %cst_56 = arith.constant 9.99999974E-6 : f32
    %127 = vector.broadcast %cst_56 : f32 to vector<8x1xf32>
    %128 = arith.addf %126, %127 : vector<8x1xf32>
    %129 = math.rsqrt %128 : vector<8x1xf32>
    %130 = vector.broadcast %129 : vector<8x1xf32> to vector<8x32xf32>
    %131 = arith.mulf %121, %130 : vector<8x32xf32>
    %132 = vector.broadcast %114 : vector<1x32xf32> to vector<8x32xf32>
    %133 = arith.mulf %131, %132 : vector<8x32xf32>
    %134 = vector.broadcast %115 : vector<1x32xf32> to vector<8x32xf32>
    %135 = arith.addf %133, %134 : vector<8x32xf32>
    %c0_57 = arith.constant 0 : index
    %c0_58 = arith.constant 0 : index
    %136 = vector.load %arg10[%c0_57, %c0_58] : memref<32x128xf32, #tpu.memory_space<vmem>>, vector<32x128xf32>
    %cst_59 = arith.constant dense<0.000000e+00> : vector<8x128xf32>
    %137 = tpu.matmul %135, %136, %cst_59 {dimension_numbers = #tpu.dot_dimension_numbers<[1], [0], [0], [1], [0, 0, 1, 1], [], []>} : vector<8x32xf32>, vector<32x128xf32>, vector<8x128xf32> -> vector<8x128xf32>
    %c0_60 = arith.constant 0 : index
    %c0_61 = arith.constant 0 : index
    %138 = vector.load %arg11[%c0_60, %c0_61] : memref<1x128xf32, #tpu.memory_space<vmem>>, vector<1x128xf32>
    %139 = vector.broadcast %138 : vector<1x128xf32> to vector<8x128xf32>
    %140 = arith.addf %137, %139 : vector<8x128xf32>
    %cst_62 = arith.constant 0.000000e+00 : f32
    %141 = vector.broadcast %cst_62 : f32 to vector<8x128xf32>
    %142 = arith.maximumf %140, %141 : vector<8x128xf32>
    %c0_63 = arith.constant 0 : index
    %c0_64 = arith.constant 0 : index
    %143 = vector.load %arg12[%c0_63, %c0_64] : memref<128x32xf32, #tpu.memory_space<vmem>>, vector<128x32xf32>
    %cst_65 = arith.constant dense<0.000000e+00> : vector<8x32xf32>
    %144 = tpu.matmul %142, %143, %cst_65 {dimension_numbers = #tpu.dot_dimension_numbers<[1], [0], [0], [1], [0, 0, 1, 1], [], []>} : vector<8x128xf32>, vector<128x32xf32>, vector<8x32xf32> -> vector<8x32xf32>
    %c0_66 = arith.constant 0 : index
    %c0_67 = arith.constant 0 : index
    %145 = vector.load %arg13[%c0_66, %c0_67] : memref<1x32xf32, #tpu.memory_space<vmem>>, vector<1x32xf32>
    %146 = vector.broadcast %145 : vector<1x32xf32> to vector<8x32xf32>
    %147 = arith.addf %144, %146 : vector<8x32xf32>
    %148 = arith.addf %147, %135 : vector<8x32xf32>
    %c0_68 = arith.constant 0 : index
    %c0_69 = arith.constant 0 : index
    %149 = vector.load %arg14[%c0_68, %c0_69] : memref<1x32xf32, #tpu.memory_space<vmem>>, vector<1x32xf32>
    %c0_70 = arith.constant 0 : index
    %c0_71 = arith.constant 0 : index
    %150 = vector.load %arg15[%c0_70, %c0_71] : memref<1x32xf32, #tpu.memory_space<vmem>>, vector<1x32xf32>
    %cst_72 = arith.constant dense<0.000000e+00> : vector<8xf32>
    %151 = vector.multi_reduction <add>, %148, %cst_72 [1] : vector<8x32xf32> to vector<8xf32>
    %152 = vector.shape_cast %151 : vector<8xf32> to vector<8x1xf32>
    %cst_73 = arith.constant 3.200000e+01 : f32
    %153 = vector.broadcast %cst_73 : f32 to vector<8x1xf32>
    %154 = arith.divf %152, %153 : vector<8x1xf32>
    %155 = vector.broadcast %154 : vector<8x1xf32> to vector<8x32xf32>
    %156 = arith.subf %148, %155 : vector<8x32xf32>
    %157 = arith.mulf %156, %156 : vector<8x32xf32>
    %cst_74 = arith.constant dense<0.000000e+00> : vector<8xf32>
    %158 = vector.multi_reduction <add>, %157, %cst_74 [1] : vector<8x32xf32> to vector<8xf32>
    %159 = vector.shape_cast %158 : vector<8xf32> to vector<8x1xf32>
    %cst_75 = arith.constant 3.200000e+01 : f32
    %160 = vector.broadcast %cst_75 : f32 to vector<8x1xf32>
    %161 = arith.divf %159, %160 : vector<8x1xf32>
    %cst_76 = arith.constant 9.99999974E-6 : f32
    %162 = vector.broadcast %cst_76 : f32 to vector<8x1xf32>
    %163 = arith.addf %161, %162 : vector<8x1xf32>
    %164 = math.rsqrt %163 : vector<8x1xf32>
    %165 = vector.broadcast %164 : vector<8x1xf32> to vector<8x32xf32>
    %166 = arith.mulf %156, %165 : vector<8x32xf32>
    %167 = vector.broadcast %149 : vector<1x32xf32> to vector<8x32xf32>
    %168 = arith.mulf %166, %167 : vector<8x32xf32>
    %169 = vector.broadcast %150 : vector<1x32xf32> to vector<8x32xf32>
    %170 = arith.addf %168, %169 : vector<8x32xf32>
    %171 = vector.shape_cast %170 : vector<8x32xf32> to vector<1x8x32xf32>
    %c0_77 = arith.constant 0 : index
    %c0_78 = arith.constant 0 : index
    %c0_79 = arith.constant 0 : index
    %172 = vector.load %arg16[%c0_77, %c0_78, %c0_79] : memref<1x8x32xf32, #tpu.memory_space<vmem>>, vector<1x8x32xf32>
    tpu.vector_store %arg16[%c0_77, %c0_78, %c0_79], %171 {strides = array<i32>} : memref<1x8x32xf32, #tpu.memory_space<vmem>>, vector<1x8x32xf32>,
    return
  }
  func.func @transform_0(%arg0: i32) -> (i32, i32, i32) {
    %c0_i32 = arith.constant 0 : i32
    %c0_i32_0 = arith.constant 0 : i32
    %c0_i32_1 = arith.constant 0 : i32
    return %arg0, %c0_i32, %c0_i32_0 : i32, i32, i32
  }
  func.func @transform_1(%arg0: i32) -> (i32, i32, i32) {
    %c0_i32 = arith.constant 0 : i32
    %c0_i32_0 = arith.constant 0 : i32
    %c0_i32_1 = arith.constant 0 : i32
    return %arg0, %c0_i32, %c0_i32_0 : i32, i32, i32
  }
  func.func @transform_2(%arg0: i32) -> (i32, i32) {
    %c0_i32 = arith.constant 0 : i32
    %c0_i32_0 = arith.constant 0 : i32
    %c0_i32_1 = arith.constant 0 : i32
    return %c0_i32, %c0_i32_0 : i32, i32
  }
  func.func @transform_3(%arg0: i32) -> (i32, i32) {
    %c0_i32 = arith.constant 0 : i32
    %c0_i32_0 = arith.constant 0 : i32
    %c0_i32_1 = arith.constant 0 : i32
    return %c0_i32, %c0_i32_0 : i32, i32
  }
  func.func @transform_4(%arg0: i32) -> (i32, i32) {
    %c0_i32 = arith.constant 0 : i32
    %c0_i32_0 = arith.constant 0 : i32
    %c0_i32_1 = arith.constant 0 : i32
    return %c0_i32, %c0_i32_0 : i32, i32
  }
  func.func @transform_5(%arg0: i32) -> (i32, i32) {
    %c0_i32 = arith.constant 0 : i32
    %c0_i32_0 = arith.constant 0 : i32
    %c0_i32_1 = arith.constant 0 : i32
    return %c0_i32, %c0_i32_0 : i32, i32
  }
  func.func @transform_6(%arg0: i32) -> (i32, i32) {
    %c0_i32 = arith.constant 0 : i32
    %c0_i32_0 = arith.constant 0 : i32
    %c0_i32_1 = arith.constant 0 : i32
    return %c0_i32, %c0_i32_0 : i32, i32
  }
  func.func @transform_7(%arg0: i32) -> (i32, i32) {
    %c0_i32 = arith.constant 0 : i32
    %c0_i32_0 = arith.constant 0 : i32
    %c0_i32_1 = arith.constant 0 : i32
    return %c0_i32, %c0_i32_0 : i32, i32
  }
  func.func @transform_8(%arg0: i32) -> (i32, i32) {
    %c0_i32 = arith.constant 0 : i32
    %c0_i32_0 = arith.constant 0 : i32
    %c0_i32_1 = arith.constant 0 : i32
    return %c0_i32, %c0_i32_0 : i32, i32
  }
  func.func @transform_9(%arg0: i32) -> (i32, i32) {
    %c0_i32 = arith.constant 0 : i32
    %c0_i32_0 = arith.constant 0 : i32
    %c0_i32_1 = arith.constant 0 : i32
    return %c0_i32, %c0_i32_0 : i32, i32
  }
  func.func @transform_10(%arg0: i32) -> (i32, i32) {
    %c0_i32 = arith.constant 0 : i32
    %c0_i32_0 = arith.constant 0 : i32
    %c0_i32_1 = arith.constant 0 : i32
    return %c0_i32, %c0_i32_0 : i32, i32
  }
  func.func @transform_11(%arg0: i32) -> (i32, i32) {
    %c0_i32 = arith.constant 0 : i32
    %c0_i32_0 = arith.constant 0 : i32
    %c0_i32_1 = arith.constant 0 : i32
    return %c0_i32, %c0_i32_0 : i32, i32
  }
  func.func @transform_12(%arg0: i32) -> (i32, i32) {
    %c0_i32 = arith.constant 0 : i32
    %c0_i32_0 = arith.constant 0 : i32
    %c0_i32_1 = arith.constant 0 : i32
    return %c0_i32, %c0_i32_0 : i32, i32
  }
  func.func @transform_13(%arg0: i32) -> (i32, i32) {
    %c0_i32 = arith.constant 0 : i32
    %c0_i32_0 = arith.constant 0 : i32
    %c0_i32_1 = arith.constant 0 : i32
    return %c0_i32, %c0_i32_0 : i32, i32
  }
  func.func @transform_14(%arg0: i32) -> (i32, i32) {
    %c0_i32 = arith.constant 0 : i32
    %c0_i32_0 = arith.constant 0 : i32
    %c0_i32_1 = arith.constant 0 : i32
    return %c0_i32, %c0_i32_0 : i32, i32
  }
  func.func @transform_15(%arg0: i32) -> (i32, i32, i32) {
    %c0_i32 = arith.constant 0 : i32
    %c0_i32_0 = arith.constant 0 : i32
    %c0_i32_1 = arith.constant 0 : i32
    return %arg0, %c0_i32, %c0_i32_0 : i32, i32, i32
  }
}

</mosaic_0001>

<llo_original>
// kernel: tpu_custom_call.1
$region0: #{tpu_custom_call.1}
  #allocation0 [shape = 'u32[]', space=smem, size = 0x4, offset = 0x4, fixed_abs, tag = 'smem constant byte address 0x4 - core index']
  #allocation1 [shape = 'u32[72,128]{1,0:T(1,128)}', space=vmem, size = 0x9000, scoped, tag = 'internal scratch']
  %s0 = inlined_call_operand.hbm [shape: f32[2,8,32], index: 0, kind: input, shape index: {}]
  %s1 = inlined_call_operand.hbm [shape: f32[2,1,8], index: 1, kind: input, shape index: {}]
  %s2 = inlined_call_operand.vmem [shape: f32[32,32], index: 2, kind: input, shape index: {}]
  %s3 = inlined_call_operand.vmem [shape: f32[32,32], index: 3, kind: input, shape index: {}]
  %s4 = inlined_call_operand.vmem [shape: f32[32,32], index: 4, kind: input, shape index: {}]
  %s5 = inlined_call_operand.vmem [shape: f32[32,32], index: 5, kind: input, shape index: {}]
  %s6 = inlined_call_operand.vmem [shape: f32[1,32], index: 6, kind: input, shape index: {}]
  %s7 = inlined_call_operand.vmem [shape: f32[1,32], index: 7, kind: input, shape index: {}]
  %s8 = inlined_call_operand.vmem [shape: f32[1,32], index: 8, kind: input, shape index: {}]
  %s9 = inlined_call_operand.vmem [shape: f32[32,128], index: 9, kind: input, shape index: {}]
  %s10 = inlined_call_operand.vmem [shape: f32[1,128], index: 10, kind: input, shape index: {}]
  %s11 = inlined_call_operand.vmem [shape: f32[128,32], index: 11, kind: input, shape index: {}]
  %s12 = inlined_call_operand.vmem [shape: f32[1,32], index: 12, kind: input, shape index: {}]
  %s13 = inlined_call_operand.vmem [shape: f32[1,32], index: 13, kind: input, shape index: {}]
  %s14 = inlined_call_operand.vmem [shape: f32[1,32], index: 14, kind: input, shape index: {}]
  %s15 = inlined_call_operand.hbm [shape: f32[2,8,32], index: 15, kind: output, shape index: {}]
  %s16 = sld [smem:[#allocation0]]
  $region101: #{tpu_custom_call.1} parent=0
    _
  %s18 = ssub.s32 1, %s16
  %s19 = scalar_select 0, %s18, %s16
  $region1: #{tpu_custom_call.1} parent=0
    #allocation2 [shape = 'u8[8192]{0}', space=vmem, size = 0x2000, scoped, tag = 'input window, operand 0']
    #allocation3 [shape = 's32[2]{0}', space=sflag, size = 0x8, scoped, tag = 'scoped memory for tpu_custom_call.1']
    #allocation4 [shape = 's32[2]{0}', space=sflag, size = 0x8, scoped, tag = 'scoped memory for tpu_custom_call.1']
    #allocation5 [shape = 'u8[1024]{0}', space=vmem, size = 0x400, scoped, tag = 'input window, operand 1']
    #allocation6 [shape = 's32[2]{0}', space=sflag, size = 0x8, scoped, tag = 'scoped memory for tpu_custom_call.1']
    #allocation7 [shape = 'u8[8192]{0}', space=vmem, size = 0x2000, scoped, tag = 'output window, operand 0']
    %20 = vsyncpa [#allocation3], 0
    %s21 = scalar_lea.sflag [#allocation3], 1
    %22 = vsyncpa %s21, 0
    %23 = vsyncpa [#allocation6], 0
    %s24 = scalar_lea.sflag [#allocation6], 1
    %25 = vsyncpa %s24, 0
    %26 = vsyncpa [#allocation4], 0
    %s27 = scalar_lea.sflag [#allocation4], 1
    %28 = vsyncpa %s27, 0
    loop: start=0, step=1, limit=4
    $region2: #{tpu_custom_call.1} parent=1 // loop_pre_header
      _
    $region3: #{tpu_custom_call.1} parent=1 // loop_header
      %s30 = sphi 0, %s34
      %p31 = scmp.ge.s32.totalorder %s30, 4
      %s40 = sphi 0, %s42
      %s43 = sphi 0, %s40
      %s44 = sphi 0, %s43
      %s60 = sphi 0, %s44
      %s66 = sphi 0, %s68
      %s69 = sphi 0, %s66
      %s70 = sphi 0, %s69
      %s86 = sphi 0, %s70
      %s90 = sphi 0, %s90
      %s92 = sphi 0, %s90
      %s93 = sphi 0, %s92
      %s107 = sphi 0, %s93
      %s111 = sphi 0, %s111
      %s113 = sphi 0, %s111
      %s114 = sphi 0, %s113
      %s128 = sphi 0, %s114
      %s132 = sphi 0, %s132
      %s134 = sphi 0, %s132
      %s135 = sphi 0, %s134
      %s149 = sphi 0, %s135
      %s153 = sphi 0, %s153
      %s155 = sphi 0, %s153
      %s156 = sphi 0, %s155
      %s170 = sphi 0, %s156
      %s174 = sphi 0, %s174
      %s176 = sphi 0, %s174
      %s177 = sphi 0, %s176
      %s191 = sphi 0, %s177
      %s195 = sphi 0, %s195
      %s197 = sphi 0, %s195
      %s198 = sphi 0, %s197
      %s212 = sphi 0, %s198
      %s216 = sphi 0, %s216
      %s218 = sphi 0, %s216
      %s219 = sphi 0, %s218
      %s233 = sphi 0, %s219
      %s237 = sphi 0, %s237
      %s239 = sphi 0, %s237
      %s240 = sphi 0, %s239
      %s254 = sphi 0, %s240
      %s258 = sphi 0, %s258
      %s260 = sphi 0, %s258
      %s261 = sphi 0, %s260
      %s275 = sphi 0, %s261
      %s279 = sphi 0, %s279
      %s281 = sphi 0, %s279
      %s282 = sphi 0, %s281
      %s296 = sphi 0, %s282
      %s300 = sphi 0, %s300
      %s302 = sphi 0, %s300
      %s303 = sphi 0, %s302
      %s317 = sphi 0, %s303
      %s321 = sphi 0, %s321
      %s323 = sphi 0, %s321
      %s324 = sphi 0, %s323
      %s338 = sphi 0, %s324
      %s342 = sphi 0, %s342
      %s344 = sphi 0, %s342
      %s345 = sphi 0, %s344
      %s359 = sphi 0, %s345
      %s365 = sphi 0, %s367
      %s368 = sphi 0, %s365
      %s369 = sphi 0, %s368
      %s385 = sphi 0, %s369
    $region4: #{tpu_custom_call.1} parent=1 // loop_header_branch
      %33 = sbr.rel (%p31) target = $region8
    $region5: #{tpu_custom_call.1} parent=1 // loop_body
      %s35 = ssub.s32 %s30, 1
      %s36 = ssub.s32 %s30, 2
      %s37 = sadd.s32 %s30, 1
      %s38 = ssub.s32 %s30, %s37
      %p39 = scmp.eq.s32.totalorder %s38, 0
      %s41 = sadd.s32 %s40, 1
      %s42 = scalar_select %p39, %s40, %s41
      %p45 = pneg %p39
      %p46 = scmp.eq.s32.totalorder %s30, 1
      %p47 = por %p45, %p46
      %p48 = scmp.ne.s32.totalorder %s40, %s43
      %p49 = scmp.eq.s32.totalorder %s30, 0
      %p50 = por %p48, %p49
      %p51 = scmp.ne.s32.totalorder %s40, %s43
      %p52 = scmp.eq.s32.totalorder %s35, 1
      %p53 = por %p51, %p52
      %p54 = scmp.ne.s32.totalorder %s43, %s44
      %p55 = scmp.eq.s32.totalorder %s35, 0
      %p56 = por %p54, %p55
      %p57 = scmp.ne.s32.totalorder %s43, %s44
      %p58 = scmp.eq.s32.totalorder %s36, 1
      %p59 = por %p57, %p58
      %p61 = scmp.ne.s32.totalorder %s44, %s60
      %p62 = scmp.eq.s32.totalorder %s36, 0
      %p63 = por %p61, %p62
      %s64 = ssub.s32 %s30, %s37
      %p65 = scmp.eq.s32.totalorder %s64, 0
      %s67 = sadd.s32 %s66, 1
      %s68 = scalar_select %p65, %s66, %s67
      %p71 = pneg %p65
      %p72 = scmp.eq.s32.totalorder %s30, 1
      %p73 = por %p71, %p72
      %p74 = scmp.ne.s32.totalorder %s66, %s69
      %p75 = scmp.eq.s32.totalorder %s30, 0
      %p76 = por %p74, %p75
      %p77 = scmp.ne.s32.totalorder %s66, %s69
      %p78 = scmp.eq.s32.totalorder %s35, 1
      %p79 = por %p77, %p78
      %p80 = scmp.ne.s32.totalorder %s69, %s70
      %p81 = scmp.eq.s32.totalorder %s35, 0
      %p82 = por %p80, %p81
      %p83 = scmp.ne.s32.totalorder %s69, %s70
      %p84 = scmp.eq.s32.totalorder %s36, 1
      %p85 = por %p83, %p84
      %p87 = scmp.ne.s32.totalorder %s70, %s86
      %p88 = scmp.eq.s32.totalorder %s36, 0
      %p89 = por %p87, %p88
      %s91 = sadd.s32 %s90, 1
      %p94 = scmp.eq.s32.totalorder %s30, 1
      %p95 = scmp.ne.s32.totalorder %s90, %s92
      %p96 = scmp.eq.s32.totalorder %s30, 0
      %p97 = por %p95, %p96
      %p98 = scmp.ne.s32.totalorder %s90, %s92
      %p99 = scmp.eq.s32.totalorder %s35, 1
      %p100 = por %p98, %p99
      %p101 = scmp.ne.s32.totalorder %s92, %s93
      %p102 = scmp.eq.s32.totalorder %s35, 0
      %p103 = por %p101, %p102
      %p104 = scmp.ne.s32.totalorder %s92, %s93
      %p105 = scmp.eq.s32.totalorder %s36, 1
      %p106 = por %p104, %p105
      %p108 = scmp.ne.s32.totalorder %s93, %s107
      %p109 = scmp.eq.s32.totalorder %s36, 0
      %p110 = por %p108, %p109
      %s112 = sadd.s32 %s111, 1
      %p115 = scmp.eq.s32.totalorder %s30, 1
      %p116 = scmp.ne.s32.totalorder %s111, %s113
      %p117 = scmp.eq.s32.totalorder %s30, 0
      %p118 = por %p116, %p117
      %p119 = scmp.ne.s32.totalorder %s111, %s113
      %p120 = scmp.eq.s32.totalorder %s35, 1
      %p121 = por %p119, %p120
      %p122 = scmp.ne.s32.totalorder %s113, %s114
      %p123 = scmp.eq.s32.totalorder %s35, 0
      %p124 = por %p122, %p123
      %p125 = scmp.ne.s32.totalorder %s113, %s114
      %p126 = scmp.eq.s32.totalorder %s36, 1
      %p127 = por %p125, %p126
      %p129 = scmp.ne.s32.totalorder %s114, %s128
      %p130 = scmp.eq.s32.totalorder %s36, 0
      %p131 = por %p129, %p130
      %s133 = sadd.s32 %s132, 1
      %p136 = scmp.eq.s32.totalorder %s30, 1
      %p137 = scmp.ne.s32.totalorder %s132, %s134
      %p138 = scmp.eq.s32.totalorder %s30, 0
      %p139 = por %p137, %p138
      %p140 = scmp.ne.s32.totalorder %s132, %s134
      %p141 = scmp.eq.s32.totalorder %s35, 1
      %p142 = por %p140, %p141
      %p143 = scmp.ne.s32.totalorder %s134, %s135
      %p144 = scmp.eq.s32.totalorder %s35, 0
      %p145 = por %p143, %p144
      %p146 = scmp.ne.s32.totalorder %s134, %s135
      %p147 = scmp.eq.s32.totalorder %s36, 1
      %p148 = por %p146, %p147
      %p150 = scmp.ne.s32.totalorder %s135, %s149
      %p151 = scmp.eq.s32.totalorder %s36, 0
      %p152 = por %p150, %p151
      %s154 = sadd.s32 %s153, 1
      %p157 = scmp.eq.s32.totalorder %s30, 1
      %p158 = scmp.ne.s32.totalorder %s153, %s155
      %p159 = scmp.eq.s32.totalorder %s30, 0
      %p160 = por %p158, %p159
      %p161 = scmp.ne.s32.totalorder %s153, %s155
      %p162 = scmp.eq.s32.totalorder %s35, 1
      %p163 = por %p161, %p162
      %p164 = scmp.ne.s32.totalorder %s155, %s156
      %p165 = scmp.eq.s32.totalorder %s35, 0
      %p166 = por %p164, %p165
      %p167 = scmp.ne.s32.totalorder %s155, %s156
      %p168 = scmp.eq.s32.totalorder %s36, 1
      %p169 = por %p167, %p168
      %p171 = scmp.ne.s32.totalorder %s156, %s170
      %p172 = scmp.eq.s32.totalorder %s36, 0
      %p173 = por %p171, %p172
      %s175 = sadd.s32 %s174, 1
      %p178 = scmp.eq.s32.totalorder %s30, 1
      %p179 = scmp.ne.s32.totalorder %s174, %s176
      %p180 = scmp.eq.s32.totalorder %s30, 0
      %p181 = por %p179, %p180
      %p182 = scmp.ne.s32.totalorder %s174, %s176
      %p183 = scmp.eq.s32.totalorder %s35, 1
      %p184 = por %p182, %p183
      %p185 = scmp.ne.s32.totalorder %s176, %s177
      %p186 = scmp.eq.s32.totalorder %s35, 0
      %p187 = por %p185, %p186
      %p188 = scmp.ne.s32.totalorder %s176, %s177
      %p189 = scmp.eq.s32.totalorder %s36, 1
      %p190 = por %p188, %p189
      %p192 = scmp.ne.s32.totalorder %s177, %s191
      %p193 = scmp.eq.s32.totalorder %s36, 0
      %p194 = por %p192, %p193
      %s196 = sadd.s32 %s195, 1
      %p199 = scmp.eq.s32.totalorder %s30, 1
      %p200 = scmp.ne.s32.totalorder %s195, %s197
      %p201 = scmp.eq.s32.totalorder %s30, 0
      %p202 = por %p200, %p201
      %p203 = scmp.ne.s32.totalorder %s195, %s197
      %p204 = scmp.eq.s32.totalorder %s35, 1
      %p205 = por %p203, %p204
      %p206 = scmp.ne.s32.totalorder %s197, %s198
      %p207 = scmp.eq.s32.totalorder %s35, 0
      %p208 = por %p206, %p207
      %p209 = scmp.ne.s32.totalorder %s197, %s198
      %p210 = scmp.eq.s32.totalorder %s36, 1
      %p211 = por %p209, %p210
      %p213 = scmp.ne.s32.totalorder %s198, %s212
      %p214 = scmp.eq.s32.totalorder %s36, 0
      %p215 = por %p213, %p214
      %s217 = sadd.s32 %s216, 1
      %p220 = scmp.eq.s32.totalorder %s30, 1
      %p221 = scmp.ne.s32.totalorder %s216, %s218
      %p222 = scmp.eq.s32.totalorder %s30, 0
      %p223 = por %p221, %p222
      %p224 = scmp.ne.s32.totalorder %s216, %s218
      %p225 = scmp.eq.s32.totalorder %s35, 1
      %p226 = por %p224, %p225
      %p227 = scmp.ne.s32.totalorder %s218, %s219
      %p228 = scmp.eq.s32.totalorder %s35, 0
      %p229 = por %p227, %p228
      %p230 = scmp.ne.s32.totalorder %s218, %s219
      %p231 = scmp.eq.s32.totalorder %s36, 1
      %p232 = por %p230, %p231
      %p234 = scmp.ne.s32.totalorder %s219, %s233
      %p235 = scmp.eq.s32.totalorder %s36, 0
      %p236 = por %p234, %p235
      %s238 = sadd.s32 %s237, 1
      %p241 = scmp.eq.s32.totalorder %s30, 1
      %p242 = scmp.ne.s32.totalorder %s237, %s239
      %p243 = scmp.eq.s32.totalorder %s30, 0
      %p244 = por %p242, %p243
      %p245 = scmp.ne.s32.totalorder %s237, %s239
      %p246 = scmp.eq.s32.totalorder %s35, 1
      %p247 = por %p245, %p246
      %p248 = scmp.ne.s32.totalorder %s239, %s240
      %p249 = scmp.eq.s32.totalorder %s35, 0
      %p250 = por %p248, %p249
      %p251 = scmp.ne.s32.totalorder %s239, %s240
      %p252 = scmp.eq.s32.totalorder %s36, 1
      %p253 = por %p251, %p252
      %p255 = scmp.ne.s32.totalorder %s240, %s254
      %p256 = scmp.eq.s32.totalorder %s36, 0
      %p257 = por %p255, %p256
      %s259 = sadd.s32 %s258, 1
      %p262 = scmp.eq.s32.totalorder %s30, 1
      %p263 = scmp.ne.s32.totalorder %s258, %s260
      %p264 = scmp.eq.s32.totalorder %s30, 0
      %p265 = por %p263, %p264
      %p266 = scmp.ne.s32.totalorder %s258, %s260
      %p267 = scmp.eq.s32.totalorder %s35, 1
      %p268 = por %p266, %p267
      %p269 = scmp.ne.s32.totalorder %s260, %s261
      %p270 = scmp.eq.s32.totalorder %s35, 0
      %p271 = por %p269, %p270
      %p272 = scmp.ne.s32.totalorder %s260, %s261
      %p273 = scmp.eq.s32.totalorder %s36, 1
      %p274 = por %p272, %p273
      %p276 = scmp.ne.s32.totalorder %s261, %s275
      %p277 = scmp.eq.s32.totalorder %s36, 0
      %p278 = por %p276, %p277
      %s280 = sadd.s32 %s279, 1
      %p283 = scmp.eq.s32.totalorder %s30, 1
      %p284 = scmp.ne.s32.totalorder %s279, %s281
      %p285 = scmp.eq.s32.totalorder %s30, 0
      %p286 = por %p284, %p285
      %p287 = scmp.ne.s32.totalorder %s279, %s281
      %p288 = scmp.eq.s32.totalorder %s35, 1
      %p289 = por %p287, %p288
      %p290 = scmp.ne.s32.totalorder %s281, %s282
      %p291 = scmp.eq.s32.totalorder %s35, 0
      %p292 = por %p290, %p291
      %p293 = scmp.ne.s32.totalorder %s281, %s282
      %p294 = scmp.eq.s32.totalorder %s36, 1
      %p295 = por %p293, %p294
      %p297 = scmp.ne.s32.totalorder %s282, %s296
      %p298 = scmp.eq.s32.totalorder %s36, 0
      %p299 = por %p297, %p298
      %s301 = sadd.s32 %s300, 1
      %p304 = scmp.eq.s32.totalorder %s30, 1
      %p305 = scmp.ne.s32.totalorder %s300, %s302
      %p306 = scmp.eq.s32.totalorder %s30, 0
      %p307 = por %p305, %p306
      %p308 = scmp.ne.s32.totalorder %s300, %s302
      %p309 = scmp.eq.s32.totalorder %s35, 1
      %p310 = por %p308, %p309
      %p311 = scmp.ne.s32.totalorder %s302, %s303
      %p312 = scmp.eq.s32.totalorder %s35, 0
      %p313 = por %p311, %p312
      %p314 = scmp.ne.s32.totalorder %s302, %s303
      %p315 = scmp.eq.s32.totalorder %s36, 1
      %p316 = por %p314, %p315
      %p318 = scmp.ne.s32.totalorder %s303, %s317
      %p319 = scmp.eq.s32.totalorder %s36, 0
      %p320 = por %p318, %p319
      %s322 = sadd.s32 %s321, 1
      %p325 = scmp.eq.s32.totalorder %s30, 1
      %p326 = scmp.ne.s32.totalorder %s321, %s323
      %p327 = scmp.eq.s32.totalorder %s30, 0
      %p328 = por %p326, %p327
      %p329 = scmp.ne.s32.totalorder %s321, %s323
      %p330 = scmp.eq.s32.totalorder %s35, 1
      %p331 = por %p329, %p330
      %p332 = scmp.ne.s32.totalorder %s323, %s324
      %p333 = scmp.eq.s32.totalorder %s35, 0
      %p334 = por %p332, %p333
      %p335 = scmp.ne.s32.totalorder %s323, %s324
      %p336 = scmp.eq.s32.totalorder %s36, 1
      %p337 = por %p335, %p336
      %p339 = scmp.ne.s32.totalorder %s324, %s338
      %p340 = scmp.eq.s32.totalorder %s36, 0
      %p341 = por %p339, %p340
      %s343 = sadd.s32 %s342, 1
      %p346 = scmp.eq.s32.totalorder %s30, 1
      %p347 = scmp.ne.s32.totalorder %s342, %s344
      %p348 = scmp.eq.s32.totalorder %s30, 0
      %p349 = por %p347, %p348
      %p350 = scmp.ne.s32.totalorder %s342, %s344
      %p351 = scmp.eq.s32.totalorder %s35, 1
      %p352 = por %p350, %p351
      %p353 = scmp.ne.s32.totalorder %s344, %s345
      %p354 = scmp.eq.s32.totalorder %s35, 0
      %p355 = por %p353, %p354
      %p356 = scmp.ne.s32.totalorder %s344, %s345
      %p357 = scmp.eq.s32.totalorder %s36, 1
      %p358 = por %p356, %p357
      %p360 = scmp.ne.s32.totalorder %s345, %s359
      %p361 = scmp.eq.s32.totalorder %s36, 0
      %p362 = por %p360, %p361
      %s363 = ssub.s32 %s30, %s37
      %p364 = scmp.eq.s32.totalorder %s363, 0
      %s366 = sadd.s32 %s365, 1
      %s367 = scalar_select %p364, %s365, %s366
      %p370 = pneg %p364
      %p371 = scmp.eq.s32.totalorder %s30, 1
      %p372 = por %p370, %p371
      %p373 = scmp.ne.s32.totalorder %s365, %s368
      %p374 = scmp.eq.s32.totalorder %s30, 0
      %p375 = por %p373, %p374
      %p376 = scmp.ne.s32.totalorder %s365, %s368
      %p377 = scmp.eq.s32.totalorder %s35, 1
      %p378 = por %p376, %p377
      %p379 = scmp.ne.s32.totalorder %s368, %s369
      %p380 = scmp.eq.s32.totalorder %s35, 0
      %p381 = por %p379, %p380
      %p382 = scmp.ne.s32.totalorder %s368, %s369
      %p383 = scmp.eq.s32.totalorder %s36, 1
      %p384 = por %p382, %p383
      %p386 = scmp.ne.s32.totalorder %s369, %s385
      %p387 = scmp.eq.s32.totalorder %s36, 0
      %p388 = por %p386, %p387
      %p389 = scmp.le.s32.totalorder 1, %s30
      %p390 = scmp.lt.s32.totalorder %s30, 3
      %p391 = pnand %p389, %p390
      %p392 = pneg %p391
      // Predicated region
      $region9: #{tpu_custom_call.1} parent=5 // pred_check
        _
      $region10: #{tpu_custom_call.1} parent=5 // pred_check_branch
        %394 = sbr.rel (%p391) target = $region12
      $region11: #{tpu_custom_call.1} parent=5 // pred_region
        %s395 = ssub.s32 %s30, 1
        // Predicated region
        $region13: #{tpu_custom_call.1} parent=11 // pred_check
          %p396 = pneg %p103
        $region14: #{tpu_custom_call.1} parent=11 // pred_check_branch
          %398 = sbr.rel (%p396) target = $region16
        $region15: #{tpu_custom_call.1} parent=11 // pred_region
          _
        $region16: #{tpu_custom_call.1} parent=11 // pred_fallthru
          _
        // Predicated region
        $region17: #{tpu_custom_call.1} parent=11 // pred_check
          %p399 = pneg %p124
        $region18: #{tpu_custom_call.1} parent=11 // pred_check_branch
          %401 = sbr.rel (%p399) target = $region20
        $region19: #{tpu_custom_call.1} parent=11 // pred_region
          _
        $region20: #{tpu_custom_call.1} parent=11 // pred_fallthru
          _
        // Predicated region
        $region21: #{tpu_custom_call.1} parent=11 // pred_check
          %p402 = pneg %p145
        $region22: #{tpu_custom_call.1} parent=11 // pred_check_branch
          %404 = sbr.rel (%p402) target = $region24
        $region23: #{tpu_custom_call.1} parent=11 // pred_region
          _
        $region24: #{tpu_custom_call.1} parent=11 // pred_fallthru
          _
        // Predicated region
        $region25: #{tpu_custom_call.1} parent=11 // pred_check
          %p405 = pneg %p166
        $region26: #{tpu_custom_call.1} parent=11 // pred_check_branch
          %407 = sbr.rel (%p405) target = $region28
        $region27: #{tpu_custom_call.1} parent=11 // pred_region
          _
        $region28: #{tpu_custom_call.1} parent=11 // pred_fallthru
          _
        // Predicated region
        $region29: #{tpu_custom_call.1} parent=11 // pred_check
          %p408 = pneg %p187
        $region30: #{tpu_custom_call.1} parent=11 // pred_check_branch
          %410 = sbr.rel (%p408) target = $region32
        $region31: #{tpu_custom_call.1} parent=11 // pred_region
          _
        $region32: #{tpu_custom_call.1} parent=11 // pred_fallthru
          _
        // Predicated region
        $region33: #{tpu_custom_call.1} parent=11 // pred_check
          %p411 = pneg %p208
        $region34: #{tpu_custom_call.1} parent=11 // pred_check_branch
          %413 = sbr.rel (%p411) target = $region36
        $region35: #{tpu_custom_call.1} parent=11 // pred_region
          _
        $region36: #{tpu_custom_call.1} parent=11 // pred_fallthru
          _
        // Predicated region
        $region37: #{tpu_custom_call.1} parent=11 // pred_check
          %p414 = pneg %p229
        $region38: #{tpu_custom_call.1} parent=11 // pred_check_branch
          %416 = sbr.rel (%p414) target = $region40
        $region39: #{tpu_custom_call.1} parent=11 // pred_region
          _
        $region40: #{tpu_custom_call.1} parent=11 // pred_fallthru
          _
        // Predicated region
        $region41: #{tpu_custom_call.1} parent=11 // pred_check
          %p417 = pneg %p250
        $region42: #{tpu_custom_call.1} parent=11 // pred_check_branch
          %419 = sbr.rel (%p417) target = $region44
        $region43: #{tpu_custom_call.1} parent=11 // pred_region
          _
        $region44: #{tpu_custom_call.1} parent=11 // pred_fallthru
          _
        // Predicated region
        $region45: #{tpu_custom_call.1} parent=11 // pred_check
          %p420 = pneg %p271
        $region46: #{tpu_custom_call.1} parent=11 // pred_check_branch
          %422 = sbr.rel (%p420) target = $region48
        $region47: #{tpu_custom_call.1} parent=11 // pred_region
          _
        $region48: #{tpu_custom_call.1} parent=11 // pred_fallthru
          _
        // Predicated region
        $region49: #{tpu_custom_call.1} parent=11 // pred_check
          %p423 = pneg %p292
        $region50: #{tpu_custom_call.1} parent=11 // pred_check_branch
          %425 = sbr.rel (%p423) target = $region52
        $region51: #{tpu_custom_call.1} parent=11 // pred_region
          _
        $region52: #{tpu_custom_call.1} parent=11 // pred_fallthru
          _
        // Predicated region
        $region53: #{tpu_custom_call.1} parent=11 // pred_check
          %p426 = pneg %p313
        $region54: #{tpu_custom_call.1} parent=11 // pred_check_branch
          %428 = sbr.rel (%p426) target = $region56
        $region55: #{tpu_custom_call.1} parent=11 // pred_region
          _
        $region56: #{tpu_custom_call.1} parent=11 // pred_fallthru
          _
        // Predicated region
        $region57: #{tpu_custom_call.1} parent=11 // pred_check
          %p429 = pneg %p334
        $region58: #{tpu_custom_call.1} parent=11 // pred_check_branch
          %431 = sbr.rel (%p429) target = $region60
        $region59: #{tpu_custom_call.1} parent=11 // pred_region
          _
        $region60: #{tpu_custom_call.1} parent=11 // pred_fallthru
          _
        // Predicated region
        $region61: #{tpu_custom_call.1} parent=11 // pred_check
          %p432 = pneg %p355
        $region62: #{tpu_custom_call.1} parent=11 // pred_check_branch
          %434 = sbr.rel (%p432) target = $region64
        $region63: #{tpu_custom_call.1} parent=11 // pred_region
          _
        $region64: #{tpu_custom_call.1} parent=11 // pred_fallthru
          _
      $region12: #{tpu_custom_call.1} parent=5 // pred_fallthru
        _
      %p435 = scmp.lt.s32.totalorder %s30, 2
      // Predicated region
      $region65: #{tpu_custom_call.1} parent=5 // pred_check
        %p436 = pneg %p435
      $region66: #{tpu_custom_call.1} parent=5 // pred_check_branch
        %438 = sbr.rel (%p436) target = $region68
      $region67: #{tpu_custom_call.1} parent=5 // pred_region
        // Predicated region
        $region69: #{tpu_custom_call.1} parent=67 // pred_check
          %p439 = pneg %p50
        $region70: #{tpu_custom_call.1} parent=67 // pred_check_branch
          %441 = sbr.rel (%p439) target = $region72
        $region71: #{tpu_custom_call.1} parent=67 // pred_region
          %s442 = sand.u32 %s40, 1
          %s443 = scalar_lea.sflag [#allocation3], %s442
          %s444 = sand.u32 %s40, 1
          %s445 = smul.addr %s444, 8
          %s446 = scalar_lea.vmem [#allocation2], %s445
          %448 = vsyncadd %s443, 0
          %s449 = smul.addr %s30, 8
          %s450 = scalar_lea.hbm %s0, %s449
          %s452 = sshll.u32 %s450, 4
          %s453 = int_to_ptr.hbm [resolvable:$true] %s452
          %s454 = sshll.u32 %s446, 4
          %s455 = int_to_ptr.vmem [resolvable:$true] %s454
          %457 = dma.hbm_to_vmem [thread:$0]  %s453, 128, %s455, %s443
        $region72: #{tpu_custom_call.1} parent=67 // pred_fallthru
          _
        // Predicated region
        $region73: #{tpu_custom_call.1} parent=67 // pred_check
          %p458 = pneg %p76
        $region74: #{tpu_custom_call.1} parent=67 // pred_check_branch
          %460 = sbr.rel (%p458) target = $region76
        $region75: #{tpu_custom_call.1} parent=67 // pred_region
          %s461 = sand.u32 %s66, 1
          %s462 = scalar_lea.sflag [#allocation6], %s461
          %s463 = sand.u32 %s66, 1
          %s464 = scalar_lea.vmem [#allocation5], %s463
          %466 = vsyncadd %s462, 0
          %s467 = scalar_lea.hbm %s1, %s30
          %s469 = sshll.u32 %s467, 4
          %s470 = int_to_ptr.hbm [resolvable:$true] %s469
          %s471 = sshll.u32 %s464, 4
          %s472 = int_to_ptr.vmem [resolvable:$true] %s471
          %474 = dma.hbm_to_vmem [thread:$0]  %s470, 16, %s472, %s462
        $region76: #{tpu_custom_call.1} parent=67 // pred_fallthru
          _
      $region68: #{tpu_custom_call.1} parent=5 // pred_fallthru
        _
      %p475 = scmp.le.s32.totalorder 1, %s30
      %p476 = scmp.lt.s32.totalorder %s30, 3
      %p477 = pnand %p475, %p476
      %p478 = pneg %p477
      // Predicated region
      $region77: #{tpu_custom_call.1} parent=5 // pred_check
        _
      $region78: #{tpu_custom_call.1} parent=5 // pred_check_branch
        %480 = sbr.rel (%p477) target = $region80
      $region79: #{tpu_custom_call.1} parent=5 // pred_region
        %s481 = ssub.s32 %s30, 1
        %s482 = sand.u32 %s43, 1
        %s483 = scalar_lea.sflag [#allocation3], %s482
        %s484 = sand.u32 %s43, 1
        %s485 = smul.addr %s484, 8
        %s486 = scalar_lea.vmem [#allocation2], %s485
        // Predicated region
        $region81: #{tpu_custom_call.1} parent=79 // pred_check
          %p487 = pneg %p56
        $region82: #{tpu_custom_call.1} parent=79 // pred_check_branch
          %489 = sbr.rel (%p487) target = $region84
        $region83: #{tpu_custom_call.1} parent=79 // pred_region
          %491 = dma.done %s483, 128
        $region84: #{tpu_custom_call.1} parent=79 // pred_fallthru
          _
        %s492 = sand.u32 %s69, 1
        %s493 = scalar_lea.sflag [#allocation6], %s492
        %s494 = sand.u32 %s69, 1
        %s495 = scalar_lea.vmem [#allocation5], %s494
        // Predicated region
        $region85: #{tpu_custom_call.1} parent=79 // pred_check
          %p496 = pneg %p82
        $region86: #{tpu_custom_call.1} parent=79 // pred_check_branch
          %498 = sbr.rel (%p496) target = $region88
        $region87: #{tpu_custom_call.1} parent=79 // pred_region
          %500 = dma.done %s493, 16
        $region88: #{tpu_custom_call.1} parent=79 // pred_fallthru
          _
        %s501 = sand.u32 %s43, 1
        %s502 = scalar_lea.sflag [#allocation3], %s501
        %s503 = sand.u32 %s43, 1
        %s504 = smul.addr %s503, 8
        %s505 = scalar_lea.vmem [#allocation2], %s504
        %p506 = pneg %p56
        %p507 = pneg %p53
        %s508 = sand.u32 %s69, 1
        %s509 = scalar_lea.sflag [#allocation6], %s508
        %s510 = sand.u32 %s69, 1
        %s511 = scalar_lea.vmem [#allocation5], %s510
        %p512 = pneg %p82
        %p513 = pneg %p79
        %p514 = pneg %p103
        %p515 = pneg %p100
        %p516 = pneg %p124
        %p517 = pneg %p121
        %p518 = pneg %p145
        %p519 = pneg %p142
        %p520 = pneg %p166
        %p521 = pneg %p163
        %p522 = pneg %p187
        %p523 = pneg %p184
        %p524 = pneg %p208
        %p525 = pneg %p205
        %p526 = pneg %p229
        %p527 = pneg %p226
        %p528 = pneg %p250
        %p529 = pneg %p247
        %p530 = pneg %p271
        %p531 = pneg %p268
        %p532 = pneg %p292
        %p533 = pneg %p289
        %p534 = pneg %p313
        %p535 = pneg %p310
        %p536 = pneg %p334
        %p537 = pneg %p331
        %p538 = pneg %p355
        %p539 = pneg %p352
        %p540 = pneg %p381
        %p541 = pneg %p378
        %s542 = sand.u32 %s368, 1
        %s543 = scalar_lea.sflag [#allocation4], %s542
        %s544 = sand.u32 %s368, 1
        %s545 = smul.addr %s544, 8
        %s546 = scalar_lea.vmem [#allocation7], %s545
        %v547 = vld [vmem:[%s486] sm:$0xff]
        %v548 = vld [vmem:[%s2] sm:$0xff]
        %v549 = vld [vmem:[%s2 + $0x8] sm:$0xff]
        %v550 = vld [vmem:[%s2 + $0x10] sm:$0xff]
        %v551 = vld [vmem:[%s2 + $0x18] sm:$0xff]
        %vm552 = vcmask 261120
        %v554 = vsel %vm552, %v547, 0
        %556 = vmatpush.msra.mxu0 0.0
        %557 = vmatpush.msra.mxu0 0.0
        %558 = vmatpush.msra.mxu0 0.0
        %559 = vmatpush.msra.mxu0 0.0
        %560 = vmatpush.msra.mxu0 0.0
        %561 = vmatpush.msra.mxu0 0.0
        %562 = vmatpush.msra.mxu0 0.0
        %563 = vmatpush.msra.mxu0 0.0
        %564 = vmatpush.msra.mxu0 0.0
        %565 = vmatpush.msra.mxu0 0.0
        %566 = vmatpush.msra.mxu0 0.0
        %567 = vmatpush.msra.mxu0 0.0
        %568 = vmatpush.msra.mxu0 %v551
        %569 = vmatpush.msra.mxu0 %v550
        %570 = vmatpush.msra.mxu0 %v549
        %571 = vmatpush.msra.mxu0 %v548
        %572 = vmatmul.f32.gmra.mxu0 %v554
        %v573 = vpop.f32.mrf.mxu0
        %v574 = vadd.f32 0.0, %v573
        %575 = vdwg.mxu0
        %v576 = vld [vmem:[%s3] sm:$0xff]
        %v577 = vld [vmem:[%s3 + $0x8] sm:$0xff]
        %v578 = vld [vmem:[%s3 + $0x10] sm:$0xff]
        %v579 = vld [vmem:[%s3 + $0x18] sm:$0xff]
        %580 = vmatpush.msra.mxu0 0.0
        %581 = vmatpush.msra.mxu0 0.0
        %582 = vmatpush.msra.mxu0 0.0
        %583 = vmatpush.msra.mxu0 0.0
        %584 = vmatpush.msra.mxu0 0.0
        %585 = vmatpush.msra.mxu0 0.0
        %586 = vmatpush.msra.mxu0 0.0
        %587 = vmatpush.msra.mxu0 0.0
        %588 = vmatpush.msra.mxu0 0.0
        %589 = vmatpush.msra.mxu0 0.0
        %590 = vmatpush.msra.mxu0 0.0
        %591 = vmatpush.msra.mxu0 0.0
        %592 = vmatpush.msra.mxu0 %v579
        %593 = vmatpush.msra.mxu0 %v578
        %594 = vmatpush.msra.mxu0 %v577
        %595 = vmatpush.msra.mxu0 %v576
        %596 = vmatmul.f32.gmra.mxu0 %v554
        %v597 = vpop.f32.mrf.mxu0
        %v598 = vadd.f32 0.0, %v597
        %599 = vdwg.mxu0
        %v600 = vld [vmem:[%s4] sm:$0xff]
        %v601 = vld [vmem:[%s4 + $0x8] sm:$0xff]
        %v602 = vld [vmem:[%s4 + $0x10] sm:$0xff]
        %v603 = vld [vmem:[%s4 + $0x18] sm:$0xff]
        %604 = vmatpush.msra.mxu0 0.0
        %605 = vmatpush.msra.mxu0 0.0
        %606 = vmatpush.msra.mxu0 0.0
        %607 = vmatpush.msra.mxu0 0.0
        %608 = vmatpush.msra.mxu0 0.0
        %609 = vmatpush.msra.mxu0 0.0
        %610 = vmatpush.msra.mxu0 0.0
        %611 = vmatpush.msra.mxu0 0.0
        %612 = vmatpush.msra.mxu0 0.0
        %613 = vmatpush.msra.mxu0 0.0
        %614 = vmatpush.msra.mxu0 0.0
        %615 = vmatpush.msra.mxu0 0.0
        %616 = vmatpush.msra.mxu0 %v603
        %617 = vmatpush.msra.mxu0 %v602
        %618 = vmatpush.msra.mxu0 %v601
        %619 = vmatpush.msra.mxu0 %v600
        %620 = vmatmul.f32.gmra.mxu0 %v554
        %v621 = vpop.f32.mrf.mxu0
        %v622 = vadd.f32 0.0, %v621
        %623 = vdwg.mxu0
        %v624 = vld [vmem:[%s495] sm:$0x1]
        %vm625 = vcmp.eq.f32.partialorder %v624, 0.0
        %v626 = vsel %vm625, -1e+30, 0.0
        %vm627 = vcmask 64512
        %v629 = vsel %vm627, %v622, 0
        %v632 = vsel %vm627, %v598, 0
        %634 = vmatpush.xpose.msra.mxu0 0.0
        %635 = vmatpush.xpose.msra.mxu0 0.0
        %636 = vmatpush.xpose.msra.mxu0 0.0
        %637 = vmatpush.xpose.msra.mxu0 0.0
        %638 = vmatpush.xpose.msra.mxu0 0.0
        %639 = vmatpush.xpose.msra.mxu0 0.0
        %640 = vmatpush.xpose.msra.mxu0 0.0
        %641 = vmatpush.xpose.msra.mxu0 0.0
        %642 = vmatpush.xpose.msra.mxu0 0.0
        %643 = vmatpush.xpose.msra.mxu0 0.0
        %644 = vmatpush.xpose.msra.mxu0 0.0
        %645 = vmatpush.xpose.msra.mxu0 0.0
        %646 = vmatpush.xpose.msra.mxu0 0.0
        %647 = vmatpush.xpose.msra.mxu0 0.0
        %648 = vmatpush.xpose.msra.mxu0 0.0
        %649 = vmatpush.xpose.msra.mxu0 %v632
        %650 = vmatmul.f32.gmra.mxu0 %v629
        %v651 = vpop.f32.mrf.mxu0
        %v652 = vadd.f32 0.0, %v651
        %653 = vdwg.mxu0
        %v654 = vmul.f32 %v652, 0.17677669
        %v656 = vperm.slane %v626, 0
        %v658 = vadd.f32 %v654, %v656
        %v659 = vsel %vm627, %v658, -inf
        %660 = vmax.xlane.f32.xlu0 %v659
        %v661 = vpop.xlane.xlu0 %660
        %v662 = vsub.f32 %v658, %v661
        %v663 = vmul.f32 %v662, 1.442695
        %v664 = vpow.pop %v663
        %v665 = vsel %vm627, %v664, 0.0
        %666 = vadd.xlane.f32.xlu0 %v665
        %v667 = vpop.xlane.xlu0 %666
        %v668 = vrcp.pop %v667
        %v669 = vmul.f32 %v664, %v668
        %v671 = vsel %vm627, %v669, 0
        %673 = vmatpush.msra.mxu0 0.0
        %674 = vmatpush.msra.mxu0 0.0
        %675 = vmatpush.msra.mxu0 0.0
        %676 = vmatpush.msra.mxu0 0.0
        %677 = vmatpush.msra.mxu0 0.0
        %678 = vmatpush.msra.mxu0 0.0
        %679 = vmatpush.msra.mxu0 0.0
        %680 = vmatpush.msra.mxu0 0.0
        %681 = vmatpush.msra.mxu0 0.0
        %682 = vmatpush.msra.mxu0 0.0
        %683 = vmatpush.msra.mxu0 0.0
        %684 = vmatpush.msra.mxu0 0.0
        %685 = vmatpush.msra.mxu0 0.0
        %686 = vmatpush.msra.mxu0 0.0
        %687 = vmatpush.msra.mxu0 0.0
        %688 = vmatpush.msra.mxu0 %v574
        %689 = vmatmul.f32.gmra.mxu0 %v671
        %v690 = vpop.f32.mrf.mxu0
        %v691 = vadd.f32 0.0, %v690
        %692 = vdwg.mxu0
        %v693 = vld [vmem:[%s5] sm:$0xff]
        %694 = vrot.lane.b32.xlu0 %v622, 120
        %v695 = vpop.permute.xlu0 %694
        %696 = vrot.lane.b32.xlu0 %v598, 120
        %v697 = vpop.permute.xlu0 %696
        %v698 = vsel %vm627, %v695, 0
        %v700 = vsel %vm627, %v697, 0
        %702 = vmatpush.xpose.msra.mxu0 0.0
        %703 = vmatpush.xpose.msra.mxu0 0.0
        %704 = vmatpush.xpose.msra.mxu0 0.0
        %705 = vmatpush.xpose.msra.mxu0 0.0
        %706 = vmatpush.xpose.msra.mxu0 0.0
        %707 = vmatpush.xpose.msra.mxu0 0.0
        %708 = vmatpush.xpose.msra.mxu0 0.0
        %709 = vmatpush.xpose.msra.mxu0 0.0
        %710 = vmatpush.xpose.msra.mxu0 0.0
        %711 = vmatpush.xpose.msra.mxu0 0.0
        %712 = vmatpush.xpose.msra.mxu0 0.0
        %713 = vmatpush.xpose.msra.mxu0 0.0
        %714 = vmatpush.xpose.msra.mxu0 0.0
        %715 = vmatpush.xpose.msra.mxu0 0.0
        %716 = vmatpush.xpose.msra.mxu0 0.0
        %717 = vmatpush.xpose.msra.mxu0 %v700
        %718 = vmatmul.f32.gmra.mxu0 %v698
        %v719 = vpop.f32.mrf.mxu0
        %v720 = vadd.f32 0.0, %v719
        %721 = vdwg.mxu0
        %v722 = vmul.f32 %v720, 0.17677669
        %v723 = vadd.f32 %v722, %v656
        %v724 = vsel %vm627, %v723, -inf
        %725 = vmax.xlane.f32.xlu0 %v724
        %v726 = vpop.xlane.xlu0 %725
        %v727 = vsub.f32 %v723, %v726
        %v728 = vmul.f32 %v727, 1.442695
        %v729 = vpow.pop %v728
        %v730 = vsel %vm627, %v729, 0.0
        %731 = vadd.xlane.f32.xlu0 %v730
        %v732 = vpop.xlane.xlu0 %731
        %v733 = vrcp.pop %v732
        %v734 = vmul.f32 %v729, %v733
        %736 = vrot.lane.b32.xlu0 %v574, 120
        %v737 = vpop.permute.xlu0 %736
        %v740 = vsel %vm627, %v734, 0
        %742 = vmatpush.msra.mxu0 0.0
        %743 = vmatpush.msra.mxu0 0.0
        %744 = vmatpush.msra.mxu0 0.0
        %745 = vmatpush.msra.mxu0 0.0
        %746 = vmatpush.msra.mxu0 0.0
        %747 = vmatpush.msra.mxu0 0.0
        %748 = vmatpush.msra.mxu0 0.0
        %749 = vmatpush.msra.mxu0 0.0
        %750 = vmatpush.msra.mxu0 0.0
        %751 = vmatpush.msra.mxu0 0.0
        %752 = vmatpush.msra.mxu0 0.0
        %753 = vmatpush.msra.mxu0 0.0
        %754 = vmatpush.msra.mxu0 0.0
        %755 = vmatpush.msra.mxu0 0.0
        %756 = vmatpush.msra.mxu0 0.0
        %757 = vmatpush.msra.mxu0 %v737
        %758 = vmatmul.f32.gmra.mxu0 %v740
        %v759 = vpop.f32.mrf.mxu0
        %v760 = vadd.f32 0.0, %v759
        %761 = vdwg.mxu0
        %v762 = vld [vmem:[%s5 + $0x8] sm:$0xff]
        %v764 = vsel %vm627, %v760, 0
        %766 = vmatpush.msra.mxu0 0.0
        %767 = vmatpush.msra.mxu0 0.0
        %768 = vmatpush.msra.mxu0 0.0
        %769 = vmatpush.msra.mxu0 0.0
        %770 = vmatpush.msra.mxu0 0.0
        %771 = vmatpush.msra.mxu0 0.0
        %772 = vmatpush.msra.mxu0 0.0
        %773 = vmatpush.msra.mxu0 0.0
        %774 = vmatpush.msra.mxu0 0.0
        %775 = vmatpush.msra.mxu0 0.0
        %776 = vmatpush.msra.mxu0 0.0
        %777 = vmatpush.msra.mxu0 0.0
        %778 = vmatpush.msra.mxu0 0.0
        %779 = vmatpush.msra.mxu0 0.0
        %780 = vmatpush.msra.mxu0 0.0
        %781 = vmatpush.msra.mxu0 %v762
        %782 = vmatmul.f32.gmra.mxu0 %v764
        %v783 = vpop.f32.mrf.mxu0
        %v784 = vadd.f32 0.0, %v783
        %785 = vdwg.mxu0
        %v787 = vsel %vm627, %v691, 0
        %789 = vmatpush.msra.mxu0 0.0
        %790 = vmatpush.msra.mxu0 0.0
        %791 = vmatpush.msra.mxu0 0.0
        %792 = vmatpush.msra.mxu0 0.0
        %793 = vmatpush.msra.mxu0 0.0
        %794 = vmatpush.msra.mxu0 0.0
        %795 = vmatpush.msra.mxu0 0.0
        %796 = vmatpush.msra.mxu0 0.0
        %797 = vmatpush.msra.mxu0 0.0
        %798 = vmatpush.msra.mxu0 0.0
        %799 = vmatpush.msra.mxu0 0.0
        %800 = vmatpush.msra.mxu0 0.0
        %801 = vmatpush.msra.mxu0 0.0
        %802 = vmatpush.msra.mxu0 0.0
        %803 = vmatpush.msra.mxu0 0.0
        %804 = vmatpush.msra.mxu0 %v693
        %805 = vmatmul.f32.gmra.mxu0 %v787
        %v806 = vpop.f32.mrf.mxu0
        %v807 = vadd.f32 %v784, %v806
        %808 = vdwg.mxu0
        %809 = vrot.lane.b32.xlu0 %v622, 112
        %v810 = vpop.permute.xlu0 %809
        %811 = vrot.lane.b32.xlu0 %v598, 112
        %v812 = vpop.permute.xlu0 %811
        %v813 = vsel %vm627, %v810, 0
        %v815 = vsel %vm627, %v812, 0
        %817 = vmatpush.xpose.msra.mxu0 0.0
        %818 = vmatpush.xpose.msra.mxu0 0.0
        %819 = vmatpush.xpose.msra.mxu0 0.0
        %820 = vmatpush.xpose.msra.mxu0 0.0
        %821 = vmatpush.xpose.msra.mxu0 0.0
        %822 = vmatpush.xpose.msra.mxu0 0.0
        %823 = vmatpush.xpose.msra.mxu0 0.0
        %824 = vmatpush.xpose.msra.mxu0 0.0
        %825 = vmatpush.xpose.msra.mxu0 0.0
        %826 = vmatpush.xpose.msra.mxu0 0.0
        %827 = vmatpush.xpose.msra.mxu0 0.0
        %828 = vmatpush.xpose.msra.mxu0 0.0
        %829 = vmatpush.xpose.msra.mxu0 0.0
        %830 = vmatpush.xpose.msra.mxu0 0.0
        %831 = vmatpush.xpose.msra.mxu0 0.0
        %832 = vmatpush.xpose.msra.mxu0 %v815
        %833 = vmatmul.f32.gmra.mxu0 %v813
        %v834 = vpop.f32.mrf.mxu0
        %v835 = vadd.f32 0.0, %v834
        %836 = vdwg.mxu0
        %v837 = vmul.f32 %v835, 0.17677669
        %v838 = vadd.f32 %v837, %v656
        %v839 = vsel %vm627, %v838, -inf
        %840 = vmax.xlane.f32.xlu0 %v839
        %v841 = vpop.xlane.xlu0 %840
        %v842 = vsub.f32 %v838, %v841
        %v843 = vmul.f32 %v842, 1.442695
        %v844 = vpow.pop %v843
        %v845 = vsel %vm627, %v844, 0.0
        %846 = vadd.xlane.f32.xlu0 %v845
        %v847 = vpop.xlane.xlu0 %846
        %v848 = vrcp.pop %v847
        %v849 = vmul.f32 %v844, %v848
        %850 = vrot.lane.b32.xlu0 %v574, 112
        %v851 = vpop.permute.xlu0 %850
        %v854 = vsel %vm627, %v849, 0
        %856 = vmatpush.msra.mxu0 0.0
        %857 = vmatpush.msra.mxu0 0.0
        %858 = vmatpush.msra.mxu0 0.0
        %859 = vmatpush.msra.mxu0 0.0
        %860 = vmatpush.msra.mxu0 0.0
        %861 = vmatpush.msra.mxu0 0.0
        %862 = vmatpush.msra.mxu0 0.0
        %863 = vmatpush.msra.mxu0 0.0
        %864 = vmatpush.msra.mxu0 0.0
        %865 = vmatpush.msra.mxu0 0.0
        %866 = vmatpush.msra.mxu0 0.0
        %867 = vmatpush.msra.mxu0 0.0
        %868 = vmatpush.msra.mxu0 0.0
        %869 = vmatpush.msra.mxu0 0.0
        %870 = vmatpush.msra.mxu0 0.0
        %871 = vmatpush.msra.mxu0 %v851
        %872 = vmatmul.f32.gmra.mxu0 %v854
        %v873 = vpop.f32.mrf.mxu0
        %v874 = vadd.f32 0.0, %v873
        %875 = vdwg.mxu0
        %v876 = vld [vmem:[%s5 + $0x10] sm:$0xff]
        %v878 = vsel %vm627, %v874, 0
        %880 = vmatpush.msra.mxu0 0.0
        %881 = vmatpush.msra.mxu0 0.0
        %882 = vmatpush.msra.mxu0 0.0
        %883 = vmatpush.msra.mxu0 0.0
        %884 = vmatpush.msra.mxu0 0.0
        %885 = vmatpush.msra.mxu0 0.0
        %886 = vmatpush.msra.mxu0 0.0
        %887 = vmatpush.msra.mxu0 0.0
        %888 = vmatpush.msra.mxu0 0.0
        %889 = vmatpush.msra.mxu0 0.0
        %890 = vmatpush.msra.mxu0 0.0
        %891 = vmatpush.msra.mxu0 0.0
        %892 = vmatpush.msra.mxu0 0.0
        %893 = vmatpush.msra.mxu0 0.0
        %894 = vmatpush.msra.mxu0 0.0
        %895 = vmatpush.msra.mxu0 %v876
        %896 = vmatmul.f32.gmra.mxu0 %v878
        %v897 = vpop.f32.mrf.mxu0
        %v898 = vadd.f32 0.0, %v897
        %899 = vdwg.mxu0
        %v900 = vadd.f32 %v807, %v898
        %901 = vrot.lane.b32.xlu0 %v622, 104
        %v902 = vpop.permute.xlu0 %901
        %903 = vrot.lane.b32.xlu0 %v598, 104
        %v904 = vpop.permute.xlu0 %903
        %v905 = vsel %vm627, %v902, 0
        %v907 = vsel %vm627, %v904, 0
        %909 = vmatpush.xpose.msra.mxu0 0.0
        %910 = vmatpush.xpose.msra.mxu0 0.0
        %911 = vmatpush.xpose.msra.mxu0 0.0
        %912 = vmatpush.xpose.msra.mxu0 0.0
        %913 = vmatpush.xpose.msra.mxu0 0.0
        %914 = vmatpush.xpose.msra.mxu0 0.0
        %915 = vmatpush.xpose.msra.mxu0 0.0
        %916 = vmatpush.xpose.msra.mxu0 0.0
        %917 = vmatpush.xpose.msra.mxu0 0.0
        %918 = vmatpush.xpose.msra.mxu0 0.0
        %919 = vmatpush.xpose.msra.mxu0 0.0
        %920 = vmatpush.xpose.msra.mxu0 0.0
        %921 = vmatpush.xpose.msra.mxu0 0.0
        %922 = vmatpush.xpose.msra.mxu0 0.0
        %923 = vmatpush.xpose.msra.mxu0 0.0
        %924 = vmatpush.xpose.msra.mxu0 %v907
        %925 = vmatmul.f32.gmra.mxu0 %v905
        %v926 = vpop.f32.mrf.mxu0
        %v927 = vadd.f32 0.0, %v926
        %928 = vdwg.mxu0
        %v929 = vmul.f32 %v927, 0.17677669
        %v930 = vadd.f32 %v929, %v656
        %v931 = vsel %vm627, %v930, -inf
        %932 = vmax.xlane.f32.xlu0 %v931
        %v933 = vpop.xlane.xlu0 %932
        %v934 = vsub.f32 %v930, %v933
        %v935 = vmul.f32 %v934, 1.442695
        %v936 = vpow.pop %v935
        %v937 = vsel %vm627, %v936, 0.0
        %938 = vadd.xlane.f32.xlu0 %v937
        %v939 = vpop.xlane.xlu0 %938
        %v940 = vrcp.pop %v939
        %v941 = vmul.f32 %v936, %v940
        %942 = vrot.lane.b32.xlu0 %v574, 104
        %v943 = vpop.permute.xlu0 %942
        %v946 = vsel %vm627, %v941, 0
        %948 = vmatpush.msra.mxu0 0.0
        %949 = vmatpush.msra.mxu0 0.0
        %950 = vmatpush.msra.mxu0 0.0
        %951 = vmatpush.msra.mxu0 0.0
        %952 = vmatpush.msra.mxu0 0.0
        %953 = vmatpush.msra.mxu0 0.0
        %954 = vmatpush.msra.mxu0 0.0
        %955 = vmatpush.msra.mxu0 0.0
        %956 = vmatpush.msra.mxu0 0.0
        %957 = vmatpush.msra.mxu0 0.0
        %958 = vmatpush.msra.mxu0 0.0
        %959 = vmatpush.msra.mxu0 0.0
        %960 = vmatpush.msra.mxu0 0.0
        %961 = vmatpush.msra.mxu0 0.0
        %962 = vmatpush.msra.mxu0 0.0
        %963 = vmatpush.msra.mxu0 %v943
        %964 = vmatmul.f32.gmra.mxu0 %v946
        %v965 = vpop.f32.mrf.mxu0
        %v966 = vadd.f32 0.0, %v965
        %967 = vdwg.mxu0
        %v968 = vld [vmem:[%s5 + $0x18] sm:$0xff]
        %v970 = vsel %vm627, %v966, 0
        %972 = vmatpush.msra.mxu0 0.0
        %973 = vmatpush.msra.mxu0 0.0
        %974 = vmatpush.msra.mxu0 0.0
        %975 = vmatpush.msra.mxu0 0.0
        %976 = vmatpush.msra.mxu0 0.0
        %977 = vmatpush.msra.mxu0 0.0
        %978 = vmatpush.msra.mxu0 0.0
        %979 = vmatpush.msra.mxu0 0.0
        %980 = vmatpush.msra.mxu0 0.0
        %981 = vmatpush.msra.mxu0 0.0
        %982 = vmatpush.msra.mxu0 0.0
        %983 = vmatpush.msra.mxu0 0.0
        %984 = vmatpush.msra.mxu0 0.0
        %985 = vmatpush.msra.mxu0 0.0
        %986 = vmatpush.msra.mxu0 0.0
        %987 = vmatpush.msra.mxu0 %v968
        %988 = vmatmul.f32.gmra.mxu0 %v970
        %v989 = vpop.f32.mrf.mxu0
        %v990 = vadd.f32 0.0, %v989
        %991 = vdwg.mxu0
        %v992 = vadd.f32 %v900, %v990
        %v993 = vld [vmem:[%s6] sm:$0x1]
        %v995 = vperm.slane %v993, 0
        %v997 = vadd.f32 %v992, %v995
        %v998 = vadd.f32 %v997, %v547
        %v999 = vld [vmem:[%s7] sm:$0x1]
        %v1000 = vld [vmem:[%s8] sm:$0x1]
        %v1001 = vsel %vm552, %v998, 0.0
        %1002 = vadd.xlane.f32.xlu0 %v1001
        %v1003 = vpop.xlane.xlu0 %1002
        %v1004 = vrcp.pop 32.0
        %v1005 = vmul.f32 32.0, %v1004
        %v1006 = vsub.f32 1.0, %v1005
        %v1007 = vmul.f32 %v1004, %v1006
        %v1008 = vadd.f32 %v1004, %v1007
        %vm1009 = vweird.f32 %v1004
        %v1010 = vsel %vm1009, %v1004, %v1008
        %v1011 = vmul.f32 %v1003, %v1010
        %v1012 = vsub.f32 %v998, %v1011
        %v1013 = vmul.f32 %v1012, %v1012
        %v1014 = vsel %vm552, %v1013, 0.0
        %1015 = vadd.xlane.f32.xlu0 %v1014
        %v1016 = vpop.xlane.xlu0 %1015
        %v1017 = vmul.f32 %v1016, %v1010
        %v1018 = vadd.f32 %v1017, 1e-05
        %v1019 = vrsqrt.pop %v1018
        %v1020 = vmul.f32 %v1019, %v1018
        %v1021 = vmul.f32 %v1020, %v1019
        %v1022 = vmul.f32 0.5, %v1021
        %v1023 = vsub.f32 1.5, %v1022
        %v1024 = vmul.f32 %v1019, %v1023
        %vm1025 = vweird.f32 %v1018
        %vm1026 = vweird.f32 %v1019
        %vm1027 = vmor %vm1025, %vm1026
        %v1028 = vsel %vm1027, %v1019, %v1024
        %v1029 = vmul.f32 %v1012, %v1028
        %v1031 = vperm.slane %v999, 0
        %v1033 = vmul.f32 %v1029, %v1031
        %v1035 = vperm.slane %v1000, 0
        %v1037 = vadd.f32 %v1033, %v1035
        %v1038 = vld [vmem:[%s9] sm:$0xff]
        %v1039 = vld [vmem:[%s9 + $0x8] sm:$0xff]
        %v1040 = vld [vmem:[%s9 + $0x10] sm:$0xff]
        %v1041 = vld [vmem:[%s9 + $0x18] sm:$0xff]
        %v1042 = vld [vmem:[%s10] sm:$0x1]
        %v1044 = vperm.slane %v1042, 0
        %v1047 = vsel %vm552, %v1037, 0
        %1049 = vmatpush.msra.mxu0 0.0
        %1050 = vmatpush.msra.mxu0 0.0
        %1051 = vmatpush.msra.mxu0 0.0
        %1052 = vmatpush.msra.mxu0 0.0
        %1053 = vmatpush.msra.mxu0 0.0
        %1054 = vmatpush.msra.mxu0 0.0
        %1055 = vmatpush.msra.mxu0 0.0
        %1056 = vmatpush.msra.mxu0 0.0
        %1057 = vmatpush.msra.mxu0 0.0
        %1058 = vmatpush.msra.mxu0 0.0
        %1059 = vmatpush.msra.mxu0 0.0
        %1060 = vmatpush.msra.mxu0 0.0
        %1061 = vmatpush.msra.mxu0 %v1041
        %1062 = vmatpush.msra.mxu0 %v1040
        %1063 = vmatpush.msra.mxu0 %v1039
        %1064 = vmatpush.msra.mxu0 %v1038
        %1065 = vmatmul.f32.gmra.mxu0 %v1047
        %v1066 = vpop.f32.mrf.mxu0
        %v1067 = vadd.f32 %v1044, %v1066
        %1068 = vdwg.mxu0
        %v1069 = vmax.f32 %v1067, 0.0
        %v1070 = vld [vmem:[%s11] sm:$0xff]
        %v1071 = vld [vmem:[%s11 + $0x8] sm:$0xff]
        %v1072 = vld [vmem:[%s11 + $0x10] sm:$0xff]
        %v1073 = vld [vmem:[%s11 + $0x18] sm:$0xff]
        %v1074 = vld [vmem:[%s11 + $0x20] sm:$0xff]
        %v1075 = vld [vmem:[%s11 + $0x28] sm:$0xff]
        %v1076 = vld [vmem:[%s11 + $0x30] sm:$0xff]
        %v1077 = vld [vmem:[%s11 + $0x38] sm:$0xff]
        %v1078 = vld [vmem:[%s11 + $0x40] sm:$0xff]
        %v1079 = vld [vmem:[%s11 + $0x48] sm:$0xff]
        %v1080 = vld [vmem:[%s11 + $0x50] sm:$0xff]
        %v1081 = vld [vmem:[%s11 + $0x58] sm:$0xff]
        %v1082 = vld [vmem:[%s11 + $0x60] sm:$0xff]
        %v1083 = vld [vmem:[%s11 + $0x68] sm:$0xff]
        %v1084 = vld [vmem:[%s11 + $0x70] sm:$0xff]
        %v1085 = vld [vmem:[%s11 + $0x78] sm:$0xff]
        %v1086 = vld [vmem:[%s12] sm:$0x1]
        %v1088 = vperm.slane %v1086, 0
        %1090 = vmatpush.msra.mxu0 %v1085
        %1091 = vmatpush.msra.mxu0 %v1084
        %1092 = vmatpush.msra.mxu0 %v1083
        %1093 = vmatpush.msra.mxu0 %v1082
        %1094 = vmatpush.msra.mxu0 %v1081
        %1095 = vmatpush.msra.mxu0 %v1080
        %1096 = vmatpush.msra.mxu0 %v1079
        %1097 = vmatpush.msra.mxu0 %v1078
        %1098 = vmatpush.msra.mxu0 %v1077
        %1099 = vmatpush.msra.mxu0 %v1076
        %1100 = vmatpush.msra.mxu0 %v1075
        %1101 = vmatpush.msra.mxu0 %v1074
        %1102 = vmatpush.msra.mxu0 %v1073
        %1103 = vmatpush.msra.mxu0 %v1072
        %1104 = vmatpush.msra.mxu0 %v1071
        %1105 = vmatpush.msra.mxu0 %v1070
        %1106 = vmatmul.f32.gmra.mxu0 %v1069
        %v1107 = vpop.f32.mrf.mxu0
        %v1108 = vadd.f32 %v1088, %v1107
        %1109 = vdwg.mxu0
        %v1110 = vadd.f32 %v1108, %v1037
        %v1111 = vld [vmem:[%s13] sm:$0x1]
        %v1112 = vld [vmem:[%s14] sm:$0x1]
        %v1113 = vsel %vm552, %v1110, 0.0
        %1114 = vadd.xlane.f32.xlu0 %v1113
        %v1115 = vpop.xlane.xlu0 %1114
        %v1116 = vmul.f32 %v1115, %v1010
        %v1117 = vsub.f32 %v1110, %v1116
        %v1118 = vmul.f32 %v1117, %v1117
        %v1119 = vsel %vm552, %v1118, 0.0
        %1120 = vadd.xlane.f32.xlu0 %v1119
        %v1121 = vpop.xlane.xlu0 %1120
        %v1122 = vmul.f32 %v1121, %v1010
        %v1123 = vadd.f32 %v1122, 1e-05
        %v1124 = vrsqrt.pop %v1123
        %v1125 = vmul.f32 %v1124, %v1123
        %v1126 = vmul.f32 %v1125, %v1124
        %v1127 = vmul.f32 0.5, %v1126
        %v1128 = vsub.f32 1.5, %v1127
        %v1129 = vmul.f32 %v1124, %v1128
        %vm1130 = vweird.f32 %v1123
        %vm1131 = vweird.f32 %v1124
        %vm1132 = vmor %vm1130, %vm1131
        %v1133 = vsel %vm1132, %v1124, %v1129
        %v1134 = vmul.f32 %v1117, %v1133
        %v1136 = vperm.slane %v1111, 0
        %v1138 = vmul.f32 %v1134, %v1136
        %v1140 = vperm.slane %v1112, 0
        %v1142 = vadd.f32 %v1138, %v1140
        %1143 = vst.msk [vmem:[%s546] sm:$0xff] %vm552, %v1142
        %s1144 = sand.u32 %s368, 1
        %s1145 = scalar_lea.sflag [#allocation4], %s1144
        %s1146 = sand.u32 %s368, 1
        %s1147 = smul.addr %s1146, 8
        %s1148 = scalar_lea.vmem [#allocation7], %s1147
        // Predicated region
        $region89: #{tpu_custom_call.1} parent=79 // pred_check
          %p1149 = pneg %p378
        $region90: #{tpu_custom_call.1} parent=79 // pred_check_branch
          %1151 = sbr.rel (%p1149) target = $region92
        $region91: #{tpu_custom_call.1} parent=79 // pred_region
          %1153 = vsyncadd %s1145, 0
          %s1154 = smul.addr %s35, 8
          %s1155 = scalar_lea.hbm %s15, %s1154
          %s1157 = sshll.u32 %s1148, 4
          %s1158 = int_to_ptr.vmem [resolvable:$true] %s1157
          %s1159 = sshll.u32 %s1155, 4
          %s1160 = int_to_ptr.hbm [resolvable:$true] %s1159
          %1162 = dma.vmem_to_hbm [thread:$0]  %s1158, 128, %s1160, %s1145
        $region92: #{tpu_custom_call.1} parent=79 // pred_fallthru
          _
      $region80: #{tpu_custom_call.1} parent=5 // pred_fallthru
        _
      %p1163 = scmp.le.s32.totalorder 2, %s30
      // Predicated region
      $region93: #{tpu_custom_call.1} parent=5 // pred_check
        %p1164 = pneg %p1163
      $region94: #{tpu_custom_call.1} parent=5 // pred_check_branch
        %1166 = sbr.rel (%p1164) target = $region96
      $region95: #{tpu_custom_call.1} parent=5 // pred_region
        %s1167 = ssub.s32 %s30, 2
        // Predicated region
        $region97: #{tpu_custom_call.1} parent=95 // pred_check
          %p1168 = pneg %p384
        $region98: #{tpu_custom_call.1} parent=95 // pred_check_branch
          %1170 = sbr.rel (%p1168) target = $region100
        $region99: #{tpu_custom_call.1} parent=95 // pred_region
          %s1171 = sand.u32 %s369, 1
          %s1172 = scalar_lea.sflag [#allocation4], %s1171
          %s1173 = sand.u32 %s369, 1
          %s1174 = smul.addr %s1173, 8
          %s1175 = scalar_lea.vmem [#allocation7], %s1174
          %1177 = dma.done %s1172, 128
        $region100: #{tpu_custom_call.1} parent=95 // pred_fallthru
          _
      $region96: #{tpu_custom_call.1} parent=5 // pred_fallthru
        _
    $region6: #{tpu_custom_call.1} parent=1 // loop_footer
      %s34 = sadd.s32 1, %s30
    $region7: #{tpu_custom_call.1} parent=1 // loop_footer_branch
      %29 = sbr.rel target = $region3
    $region8: #{tpu_custom_call.1} parent=1 // loop_exit
      _
    %1178 = vsyncpa [#allocation3], 1
    %s1179 = scalar_lea.sflag [#allocation3], 1
    %1180 = vsyncpa %s1179, 1
    %1181 = vsyncpa [#allocation6], 1
    %s1182 = scalar_lea.sflag [#allocation6], 1
    %1183 = vsyncpa %s1182, 1
    %1184 = vsyncpa [#allocation4], 1
    %s1185 = scalar_lea.sflag [#allocation4], 1
    %1186 = vsyncpa %s1185, 1

</llo_original>
